<compile_context>
chip_gen: v7x
topology: tpu7x:2x2x1
jax: 0.10.0
libtpu: 0.0.40
codegen_flags: <defaults>
</compile_context>

<pallas_src>
import functools

import numpy as np
import jax
import jax.numpy as jnp
from jax.experimental import pallas as pl
from jax.experimental.pallas import tpu as pltpu


def _round_up(n, m):
    return ((n + m - 1) // m) * m


def _pad_gate_cols(w_t, H, HP):
    """w_t: (rows, 4H) with columns in gate order i,f,g,o -> (rows, 4*HP), each gate block zero-padded."""
    rows = w_t.shape[0]
    out = jnp.zeros((rows, 4 * HP), jnp.float32)
    for k in range(4):
        out = out.at[:, k * HP:k * HP + H].set(w_t[:, k * H:(k + 1) * H].astype(jnp.float32))
    return out


def lstm_kernel(x_ref, w_ih_t_ref, w_hh_t_ref, bias_ref, w_lin_t_ref, b_lin_ref,
                out_ref, *, hid_pad, seq_len):
    HP = hid_pad

    x = x_ref[...]              # (T, in_dim)        f32
    w_ih_t = w_ih_t_ref[...]    # (in_dim, 4*HP)     pre-transposed, gate-padded
    w_hh_t = w_hh_t_ref[...]    # (HP, 4*HP)         pre-transposed, gate-padded
    bias = bias_ref[...]        # (1, 4*HP)          b_ih + b_hh, gate-padded

    # One MXU matmul for all timesteps' input projections, biases folded in once.
    x_proj = jnp.dot(x, w_ih_t, preferred_element_type=jnp.float32) + bias   # (T, 4*HP)

    h = jnp.zeros((1, HP), jnp.float32)
    c = jnp.zeros((1, HP), jnp.float32)

    # Fully unrolled recurrence: seq_len is static and small, so slices of x_proj are static
    # sublane picks, there is no loop/branch overhead, and the scheduler can overlap
    # independent work across steps. Tiny (1, HP) state -> no spill risk.
    for t in range(seq_len):
        gates = x_proj[t:t + 1, :] + jnp.dot(h, w_hh_t,
                                             preferred_element_type=jnp.float32)  # (1, 4*HP)
        # Lane-aligned gate blocks: [0:HP]=i, [HP:2HP]=f, [2HP:3HP]=g, [3HP:4HP]=o.
        if_act = jax.nn.sigmoid(gates[:, 0:2 * HP])          # i and f in one call
        i_g = if_act[:, 0:HP]
        f_g = if_act[:, HP:2 * HP]
        g_g = jnp.tanh(gates[:, 2 * HP:3 * HP])
        o_g = jax.nn.sigmoid(gates[:, 3 * HP:4 * HP])
        c = f_g * c + i_g * g_g
        h = o_g * jnp.tanh(c)

    # predictions[-1] = linear(h_T); output padded to lane width for an unmasked store.
    out_ref[...] = (jnp.dot(h, w_lin_t_ref[...], preferred_element_type=jnp.float32)
                    + b_lin_ref[...])


def lstm_forward(x, w_ih, w_hh, b_ih, b_hh, w_lin, b_lin):
    """Single-sequence (batch=1) LSTM forward, returns linear(h_T) as shape (out_dim,) float32."""
    seq_len, _ = x.shape
    H = w_hh.shape[1]
    out_dim = w_lin.shape[0]

    HP = _round_up(max(H, 128), 128)        # pad hidden so each gate is a full 128-lane block
    OP = _round_up(max(out_dim, 128), 128)  # lane-dense output store

    # Wrapper-side (trace-time) weight prep: transpose, gate-pad, fold biases. All loop-invariant.
    w_ih_t = _pad_gate_cols(jnp.asarray(w_ih, jnp.float32).T, H, HP)              # (in_dim, 4*HP)
    w_hh_t = jnp.zeros((HP, 4 * HP), jnp.float32).at[:H, :].set(
        _pad_gate_cols(jnp.asarray(w_hh, jnp.float32).T, H, HP))                  # (HP, 4*HP)
    bias = _pad_gate_cols(
        (jnp.asarray(b_ih, jnp.float32) + jnp.asarray(b_hh, jnp.float32)).reshape(1, 4 * H),
        H, HP)                                                                     # (1, 4*HP)
    w_lin_t = jnp.zeros((HP, OP), jnp.float32).at[:H, :out_dim].set(
        jnp.asarray(w_lin, jnp.float32).T)                                         # (HP, OP)
    b_lin_p = jnp.zeros((1, OP), jnp.float32).at[:, :out_dim].set(
        jnp.asarray(b_lin, jnp.float32).reshape(1, out_dim))                       # (1, OP)

    vmem_spec = pl.BlockSpec(memory_space=pltpu.MemorySpace.VMEM)
    kernel = functools.partial(lstm_kernel, hid_pad=HP, seq_len=seq_len)

    # Whole working set is << VMEM on every generation; single call, no grid needed.
    # TODO(synk): if many sequences were evaluated, add a ("parallel",) grid axis over
    # sequences with resident-weight BlockSpecs (index_map -> 0) to amortize launch + weight DMA.
    pred_pad = pl.pallas_call(
        kernel,
        out_shape=jax.ShapeDtypeStruct((1, OP), jnp.float32),
        in_specs=[vmem_spec] * 6,
        out_specs=vmem_spec,
    )(jnp.asarray(x, jnp.float32), w_ih_t, w_hh_t, bias, w_lin_t, b_lin_p)

    return pred_pad[0, :out_dim]


def reference_forward(x, w_ih, w_hh, b_ih, b_hh, w_lin, b_lin):
    """Pure-JAX reference of the PyTorch forward (for a sanity check)."""
    H = w_hh.shape[1]
    h = jnp.zeros((1, H), jnp.float32)
    c = jnp.zeros((1, H), jnp.float32)
    for t in range(x.shape[0]):
        gates = x[t:t + 1] @ w_ih.T + b_ih + h @ w_hh.T + b_hh
        i = jax.nn.sigmoid(gates[:, 0:H])
        f = jax.nn.sigmoid(gates[:, H:2 * H])
        g = jnp.tanh(gates[:, 2 * H:3 * H])
        o = jax.nn.sigmoid(gates[:, 3 * H:4 * H])
        c = f * c + i * g
        h = o * jnp.tanh(c)
    return (h @ w_lin.T + b_lin).reshape(-1)


if __name__ == "__main__":
    # Small shapes consistent with the module: seq=8, in_dim=16, hid=32, out=4.
    seq_len, in_dim, hid_dim, out_dim = 8, 16, 32, 4

    key = jax.random.PRNGKey(0)
    ks = jax.random.split(key, 8)
    scale = 1.0 / float(np.sqrt(hid_dim))  # PyTorch-style uniform(-1/sqrt(H), 1/sqrt(H)) init

    x     = jax.random.normal(ks[0], (seq_len, in_dim), dtype=jnp.float32)
    w_ih  = jax.random.uniform(ks[1], (4 * hid_dim, in_dim), jnp.float32, -scale, scale)
    w_hh  = jax.random.uniform(ks[2], (4 * hid_dim, hid_dim), jnp.float32, -scale, scale)
    b_ih  = jax.random.uniform(ks[3], (1, 4 * hid_dim), jnp.float32, -scale, scale)
    b_hh  = jax.random.uniform(ks[4], (1, 4 * hid_dim), jnp.float32, -scale, scale)
    w_lin = jax.random.uniform(ks[5], (out_dim, hid_dim), jnp.float32, -scale, scale)
    b_lin = jax.random.uniform(ks[6], (1, out_dim), jnp.float32, -scale, scale)

    pred = lstm_forward(x, w_ih, w_hh, b_ih, b_hh, w_lin, b_lin)
    pred = jax.block_until_ready(pred)

    # `.double()` of the torch module: host-side cast (keeps the Pallas/XLA path pure f32).
    pred64 = np.asarray(pred, dtype=np.float64)
    ref64 = np.asarray(reference_forward(x, w_ih, w_hh, b_ih, b_hh, w_lin, b_lin),
                       dtype=np.float64)

    assert pred64.shape == (out_dim,) and pred64.dtype == np.float64
    assert np.allclose(pred64, ref64, atol=1e-4, rtol=1e-4)

    print("KERNEL_OK")
</pallas_src>

<mosaic_0001>
module attributes {stable_mosaic.version = 11 : i64} {
  func.func @lstm_kernel(%arg0: memref<8x16xf32, #tpu.memory_space<vmem>>, %arg1: memref<16x512xf32, #tpu.memory_space<vmem>>, %arg2: memref<128x512xf32, #tpu.memory_space<vmem>>, %arg3: memref<1x512xf32, #tpu.memory_space<vmem>>, %arg4: memref<128x128xf32, #tpu.memory_space<vmem>>, %arg5: memref<1x128xf32, #tpu.memory_space<vmem>>, %arg6: memref<1x128xf32, #tpu.memory_space<vmem>>) attributes {dimension_semantics = [], scalar_prefetch = 0 : i64, scratch_operands = 0 : i64, tpu.core_type = #tpu.core_type<tc>} {
    %c0 = arith.constant 0 : index
    %c0_0 = arith.constant 0 : index
    %0 = vector.load %arg0[%c0, %c0_0] : memref<8x16xf32, #tpu.memory_space<vmem>>, vector<8x16xf32>
    %c0_1 = arith.constant 0 : index
    %c0_2 = arith.constant 0 : index
    %1 = vector.load %arg1[%c0_1, %c0_2] : memref<16x512xf32, #tpu.memory_space<vmem>>, vector<16x512xf32>
    %c0_3 = arith.constant 0 : index
    %c0_4 = arith.constant 0 : index
    %2 = vector.load %arg2[%c0_3, %c0_4] : memref<128x512xf32, #tpu.memory_space<vmem>>, vector<128x512xf32>
    %c0_5 = arith.constant 0 : index
    %c0_6 = arith.constant 0 : index
    %3 = vector.load %arg3[%c0_5, %c0_6] : memref<1x512xf32, #tpu.memory_space<vmem>>, vector<1x512xf32>
    %cst = arith.constant dense<0.000000e+00> : vector<8x512xf32>
    %4 = tpu.matmul %0, %1, %cst {dimension_numbers = #tpu.dot_dimension_numbers<[1], [0], [0], [1], [0, 0, 1, 1], [], []>} : vector<8x16xf32>, vector<16x512xf32>, vector<8x512xf32> -> vector<8x512xf32>
    %5 = vector.broadcast %3 : vector<1x512xf32> to vector<8x512xf32>
    %6 = arith.addf %4, %5 : vector<8x512xf32>
    %cst_7 = arith.constant 0.000000e+00 : f32
    %7 = vector.broadcast %cst_7 : f32 to vector<1x128xf32>
    %cst_8 = arith.constant 0.000000e+00 : f32
    %8 = vector.broadcast %cst_8 : f32 to vector<1x128xf32>
    %9 = vector.extract_strided_slice %6 {offsets = [0, 0], sizes = [1, 512], strides = [1, 1]} : vector<8x512xf32> to vector<1x512xf32>
    %cst_9 = arith.constant dense<0.000000e+00> : vector<1x512xf32>
    %10 = tpu.matmul %7, %2, %cst_9 {dimension_numbers = #tpu.dot_dimension_numbers<[1], [0], [0], [1], [0, 0, 1, 1], [], []>} : vector<1x128xf32>, vector<128x512xf32>, vector<1x512xf32> -> vector<1x512xf32>
    %11 = arith.addf %9, %10 : vector<1x512xf32>
    %12 = vector.extract_strided_slice %11 {offsets = [0, 0], sizes = [1, 256], strides = [1, 1]} : vector<1x512xf32> to vector<1x256xf32>
    %13 = arith.negf %12 : vector<1x256xf32>
    %14 = math.exp %13 : vector<1x256xf32>
    %cst_10 = arith.constant 1.000000e+00 : f32
    %15 = vector.broadcast %cst_10 : f32 to vector<1x256xf32>
    %16 = arith.addf %15, %14 : vector<1x256xf32>
    %17 = arith.divf %15, %16 : vector<1x256xf32>
    %18 = vector.extract_strided_slice %17 {offsets = [0, 0], sizes = [1, 128], strides = [1, 1]} : vector<1x256xf32> to vector<1x128xf32>
    %19 = vector.extract_strided_slice %17 {offsets = [0, 128], sizes = [1, 128], strides = [1, 1]} : vector<1x256xf32> to vector<1x128xf32>
    %20 = vector.extract_strided_slice %11 {offsets = [0, 256], sizes = [1, 128], strides = [1, 1]} : vector<1x512xf32> to vector<1x128xf32>
    %21 = math.tanh %20 : vector<1x128xf32>
    %22 = vector.extract_strided_slice %11 {offsets = [0, 384], sizes = [1, 128], strides = [1, 1]} : vector<1x512xf32> to vector<1x128xf32>
    %23 = arith.negf %22 : vector<1x128xf32>
    %24 = math.exp %23 : vector<1x128xf32>
    %cst_11 = arith.constant 1.000000e+00 : f32
    %25 = vector.broadcast %cst_11 : f32 to vector<1x128xf32>
    %26 = arith.addf %25, %24 : vector<1x128xf32>
    %27 = arith.divf %25, %26 : vector<1x128xf32>
    %28 = arith.mulf %19, %8 : vector<1x128xf32>
    %29 = arith.mulf %18, %21 : vector<1x128xf32>
    %30 = arith.addf %28, %29 : vector<1x128xf32>
    %31 = math.tanh %30 : vector<1x128xf32>
    %32 = arith.mulf %27, %31 : vector<1x128xf32>
    %33 = vector.extract_strided_slice %6 {offsets = [1, 0], sizes = [1, 512], strides = [1, 1]} : vector<8x512xf32> to vector<1x512xf32>
    %cst_12 = arith.constant dense<0.000000e+00> : vector<1x512xf32>
    %34 = tpu.matmul %32, %2, %cst_12 {dimension_numbers = #tpu.dot_dimension_numbers<[1], [0], [0], [1], [0, 0, 1, 1], [], []>} : vector<1x128xf32>, vector<128x512xf32>, vector<1x512xf32> -> vector<1x512xf32>
    %35 = arith.addf %33, %34 : vector<1x512xf32>
    %36 = vector.extract_strided_slice %35 {offsets = [0, 0], sizes = [1, 256], strides = [1, 1]} : vector<1x512xf32> to vector<1x256xf32>
    %37 = arith.negf %36 : vector<1x256xf32>
    %38 = math.exp %37 : vector<1x256xf32>
    %cst_13 = arith.constant 1.000000e+00 : f32
    %39 = vector.broadcast %cst_13 : f32 to vector<1x256xf32>
    %40 = arith.addf %39, %38 : vector<1x256xf32>
    %41 = arith.divf %39, %40 : vector<1x256xf32>
    %42 = vector.extract_strided_slice %41 {offsets = [0, 0], sizes = [1, 128], strides = [1, 1]} : vector<1x256xf32> to vector<1x128xf32>
    %43 = vector.extract_strided_slice %41 {offsets = [0, 128], sizes = [1, 128], strides = [1, 1]} : vector<1x256xf32> to vector<1x128xf32>
    %44 = vector.extract_strided_slice %35 {offsets = [0, 256], sizes = [1, 128], strides = [1, 1]} : vector<1x512xf32> to vector<1x128xf32>
    %45 = math.tanh %44 : vector<1x128xf32>
    %46 = vector.extract_strided_slice %35 {offsets = [0, 384], sizes = [1, 128], strides = [1, 1]} : vector<1x512xf32> to vector<1x128xf32>
    %47 = arith.negf %46 : vector<1x128xf32>
    %48 = math.exp %47 : vector<1x128xf32>
    %cst_14 = arith.constant 1.000000e+00 : f32
    %49 = vector.broadcast %cst_14 : f32 to vector<1x128xf32>
    %50 = arith.addf %49, %48 : vector<1x128xf32>
    %51 = arith.divf %49, %50 : vector<1x128xf32>
    %52 = arith.mulf %43, %30 : vector<1x128xf32>
    %53 = arith.mulf %42, %45 : vector<1x128xf32>
    %54 = arith.addf %52, %53 : vector<1x128xf32>
    %55 = math.tanh %54 : vector<1x128xf32>
    %56 = arith.mulf %51, %55 : vector<1x128xf32>
    %57 = vector.extract_strided_slice %6 {offsets = [2, 0], sizes = [1, 512], strides = [1, 1]} : vector<8x512xf32> to vector<1x512xf32>
    %cst_15 = arith.constant dense<0.000000e+00> : vector<1x512xf32>
    %58 = tpu.matmul %56, %2, %cst_15 {dimension_numbers = #tpu.dot_dimension_numbers<[1], [0], [0], [1], [0, 0, 1, 1], [], []>} : vector<1x128xf32>, vector<128x512xf32>, vector<1x512xf32> -> vector<1x512xf32>
    %59 = arith.addf %57, %58 : vector<1x512xf32>
    %60 = vector.extract_strided_slice %59 {offsets = [0, 0], sizes = [1, 256], strides = [1, 1]} : vector<1x512xf32> to vector<1x256xf32>
    %61 = arith.negf %60 : vector<1x256xf32>
    %62 = math.exp %61 : vector<1x256xf32>
    %cst_16 = arith.constant 1.000000e+00 : f32
    %63 = vector.broadcast %cst_16 : f32 to vector<1x256xf32>
    %64 = arith.addf %63, %62 : vector<1x256xf32>
    %65 = arith.divf %63, %64 : vector<1x256xf32>
    %66 = vector.extract_strided_slice %65 {offsets = [0, 0], sizes = [1, 128], strides = [1, 1]} : vector<1x256xf32> to vector<1x128xf32>
    %67 = vector.extract_strided_slice %65 {offsets = [0, 128], sizes = [1, 128], strides = [1, 1]} : vector<1x256xf32> to vector<1x128xf32>
    %68 = vector.extract_strided_slice %59 {offsets = [0, 256], sizes = [1, 128], strides = [1, 1]} : vector<1x512xf32> to vector<1x128xf32>
    %69 = math.tanh %68 : vector<1x128xf32>
    %70 = vector.extract_strided_slice %59 {offsets = [0, 384], sizes = [1, 128], strides = [1, 1]} : vector<1x512xf32> to vector<1x128xf32>
    %71 = arith.negf %70 : vector<1x128xf32>
    %72 = math.exp %71 : vector<1x128xf32>
    %cst_17 = arith.constant 1.000000e+00 : f32
    %73 = vector.broadcast %cst_17 : f32 to vector<1x128xf32>
    %74 = arith.addf %73, %72 : vector<1x128xf32>
    %75 = arith.divf %73, %74 : vector<1x128xf32>
    %76 = arith.mulf %67, %54 : vector<1x128xf32>
    %77 = arith.mulf %66, %69 : vector<1x128xf32>
    %78 = arith.addf %76, %77 : vector<1x128xf32>
    %79 = math.tanh %78 : vector<1x128xf32>
    %80 = arith.mulf %75, %79 : vector<1x128xf32>
    %81 = vector.extract_strided_slice %6 {offsets = [3, 0], sizes = [1, 512], strides = [1, 1]} : vector<8x512xf32> to vector<1x512xf32>
    %cst_18 = arith.constant dense<0.000000e+00> : vector<1x512xf32>
    %82 = tpu.matmul %80, %2, %cst_18 {dimension_numbers = #tpu.dot_dimension_numbers<[1], [0], [0], [1], [0, 0, 1, 1], [], []>} : vector<1x128xf32>, vector<128x512xf32>, vector<1x512xf32> -> vector<1x512xf32>
    %83 = arith.addf %81, %82 : vector<1x512xf32>
    %84 = vector.extract_strided_slice %83 {offsets = [0, 0], sizes = [1, 256], strides = [1, 1]} : vector<1x512xf32> to vector<1x256xf32>
    %85 = arith.negf %84 : vector<1x256xf32>
    %86 = math.exp %85 : vector<1x256xf32>
    %cst_19 = arith.constant 1.000000e+00 : f32
    %87 = vector.broadcast %cst_19 : f32 to vector<1x256xf32>
    %88 = arith.addf %87, %86 : vector<1x256xf32>
    %89 = arith.divf %87, %88 : vector<1x256xf32>
    %90 = vector.extract_strided_slice %89 {offsets = [0, 0], sizes = [1, 128], strides = [1, 1]} : vector<1x256xf32> to vector<1x128xf32>
    %91 = vector.extract_strided_slice %89 {offsets = [0, 128], sizes = [1, 128], strides = [1, 1]} : vector<1x256xf32> to vector<1x128xf32>
    %92 = vector.extract_strided_slice %83 {offsets = [0, 256], sizes = [1, 128], strides = [1, 1]} : vector<1x512xf32> to vector<1x128xf32>
    %93 = math.tanh %92 : vector<1x128xf32>
    %94 = vector.extract_strided_slice %83 {offsets = [0, 384], sizes = [1, 128], strides = [1, 1]} : vector<1x512xf32> to vector<1x128xf32>
    %95 = arith.negf %94 : vector<1x128xf32>
    %96 = math.exp %95 : vector<1x128xf32>
    %cst_20 = arith.constant 1.000000e+00 : f32
    %97 = vector.broadcast %cst_20 : f32 to vector<1x128xf32>
    %98 = arith.addf %97, %96 : vector<1x128xf32>
    %99 = arith.divf %97, %98 : vector<1x128xf32>
    %100 = arith.mulf %91, %78 : vector<1x128xf32>
    %101 = arith.mulf %90, %93 : vector<1x128xf32>
    %102 = arith.addf %100, %101 : vector<1x128xf32>
    %103 = math.tanh %102 : vector<1x128xf32>
    %104 = arith.mulf %99, %103 : vector<1x128xf32>
    %105 = vector.extract_strided_slice %6 {offsets = [4, 0], sizes = [1, 512], strides = [1, 1]} : vector<8x512xf32> to vector<1x512xf32>
    %cst_21 = arith.constant dense<0.000000e+00> : vector<1x512xf32>
    %106 = tpu.matmul %104, %2, %cst_21 {dimension_numbers = #tpu.dot_dimension_numbers<[1], [0], [0], [1], [0, 0, 1, 1], [], []>} : vector<1x128xf32>, vector<128x512xf32>, vector<1x512xf32> -> vector<1x512xf32>
    %107 = arith.addf %105, %106 : vector<1x512xf32>
    %108 = vector.extract_strided_slice %107 {offsets = [0, 0], sizes = [1, 256], strides = [1, 1]} : vector<1x512xf32> to vector<1x256xf32>
    %109 = arith.negf %108 : vector<1x256xf32>
    %110 = math.exp %109 : vector<1x256xf32>
    %cst_22 = arith.constant 1.000000e+00 : f32
    %111 = vector.broadcast %cst_22 : f32 to vector<1x256xf32>
    %112 = arith.addf %111, %110 : vector<1x256xf32>
    %113 = arith.divf %111, %112 : vector<1x256xf32>
    %114 = vector.extract_strided_slice %113 {offsets = [0, 0], sizes = [1, 128], strides = [1, 1]} : vector<1x256xf32> to vector<1x128xf32>
    %115 = vector.extract_strided_slice %113 {offsets = [0, 128], sizes = [1, 128], strides = [1, 1]} : vector<1x256xf32> to vector<1x128xf32>
    %116 = vector.extract_strided_slice %107 {offsets = [0, 256], sizes = [1, 128], strides = [1, 1]} : vector<1x512xf32> to vector<1x128xf32>
    %117 = math.tanh %116 : vector<1x128xf32>
    %118 = vector.extract_strided_slice %107 {offsets = [0, 384], sizes = [1, 128], strides = [1, 1]} : vector<1x512xf32> to vector<1x128xf32>
    %119 = arith.negf %118 : vector<1x128xf32>
    %120 = math.exp %119 : vector<1x128xf32>
    %cst_23 = arith.constant 1.000000e+00 : f32
    %121 = vector.broadcast %cst_23 : f32 to vector<1x128xf32>
    %122 = arith.addf %121, %120 : vector<1x128xf32>
    %123 = arith.divf %121, %122 : vector<1x128xf32>
    %124 = arith.mulf %115, %102 : vector<1x128xf32>
    %125 = arith.mulf %114, %117 : vector<1x128xf32>
    %126 = arith.addf %124, %125 : vector<1x128xf32>
    %127 = math.tanh %126 : vector<1x128xf32>
    %128 = arith.mulf %123, %127 : vector<1x128xf32>
    %129 = vector.extract_strided_slice %6 {offsets = [5, 0], sizes = [1, 512], strides = [1, 1]} : vector<8x512xf32> to vector<1x512xf32>
    %cst_24 = arith.constant dense<0.000000e+00> : vector<1x512xf32>
    %130 = tpu.matmul %128, %2, %cst_24 {dimension_numbers = #tpu.dot_dimension_numbers<[1], [0], [0], [1], [0, 0, 1, 1], [], []>} : vector<1x128xf32>, vector<128x512xf32>, vector<1x512xf32> -> vector<1x512xf32>
    %131 = arith.addf %129, %130 : vector<1x512xf32>
    %132 = vector.extract_strided_slice %131 {offsets = [0, 0], sizes = [1, 256], strides = [1, 1]} : vector<1x512xf32> to vector<1x256xf32>
    %133 = arith.negf %132 : vector<1x256xf32>
    %134 = math.exp %133 : vector<1x256xf32>
    %cst_25 = arith.constant 1.000000e+00 : f32
    %135 = vector.broadcast %cst_25 : f32 to vector<1x256xf32>
    %136 = arith.addf %135, %134 : vector<1x256xf32>
    %137 = arith.divf %135, %136 : vector<1x256xf32>
    %138 = vector.extract_strided_slice %137 {offsets = [0, 0], sizes = [1, 128], strides = [1, 1]} : vector<1x256xf32> to vector<1x128xf32>
    %139 = vector.extract_strided_slice %137 {offsets = [0, 128], sizes = [1, 128], strides = [1, 1]} : vector<1x256xf32> to vector<1x128xf32>
    %140 = vector.extract_strided_slice %131 {offsets = [0, 256], sizes = [1, 128], strides = [1, 1]} : vector<1x512xf32> to vector<1x128xf32>
    %141 = math.tanh %140 : vector<1x128xf32>
    %142 = vector.extract_strided_slice %131 {offsets = [0, 384], sizes = [1, 128], strides = [1, 1]} : vector<1x512xf32> to vector<1x128xf32>
    %143 = arith.negf %142 : vector<1x128xf32>
    %144 = math.exp %143 : vector<1x128xf32>
    %cst_26 = arith.constant 1.000000e+00 : f32
    %145 = vector.broadcast %cst_26 : f32 to vector<1x128xf32>
    %146 = arith.addf %145, %144 : vector<1x128xf32>
    %147 = arith.divf %145, %146 : vector<1x128xf32>
    %148 = arith.mulf %139, %126 : vector<1x128xf32>
    %149 = arith.mulf %138, %141 : vector<1x128xf32>
    %150 = arith.addf %148, %149 : vector<1x128xf32>
    %151 = math.tanh %150 : vector<1x128xf32>
    %152 = arith.mulf %147, %151 : vector<1x128xf32>
    %153 = vector.extract_strided_slice %6 {offsets = [6, 0], sizes = [1, 512], strides = [1, 1]} : vector<8x512xf32> to vector<1x512xf32>
    %cst_27 = arith.constant dense<0.000000e+00> : vector<1x512xf32>
    %154 = tpu.matmul %152, %2, %cst_27 {dimension_numbers = #tpu.dot_dimension_numbers<[1], [0], [0], [1], [0, 0, 1, 1], [], []>} : vector<1x128xf32>, vector<128x512xf32>, vector<1x512xf32> -> vector<1x512xf32>
    %155 = arith.addf %153, %154 : vector<1x512xf32>
    %156 = vector.extract_strided_slice %155 {offsets = [0, 0], sizes = [1, 256], strides = [1, 1]} : vector<1x512xf32> to vector<1x256xf32>
    %157 = arith.negf %156 : vector<1x256xf32>
    %158 = math.exp %157 : vector<1x256xf32>
    %cst_28 = arith.constant 1.000000e+00 : f32
    %159 = vector.broadcast %cst_28 : f32 to vector<1x256xf32>
    %160 = arith.addf %159, %158 : vector<1x256xf32>
    %161 = arith.divf %159, %160 : vector<1x256xf32>
    %162 = vector.extract_strided_slice %161 {offsets = [0, 0], sizes = [1, 128], strides = [1, 1]} : vector<1x256xf32> to vector<1x128xf32>
    %163 = vector.extract_strided_slice %161 {offsets = [0, 128], sizes = [1, 128], strides = [1, 1]} : vector<1x256xf32> to vector<1x128xf32>
    %164 = vector.extract_strided_slice %155 {offsets = [0, 256], sizes = [1, 128], strides = [1, 1]} : vector<1x512xf32> to vector<1x128xf32>
    %165 = math.tanh %164 : vector<1x128xf32>
    %166 = vector.extract_strided_slice %155 {offsets = [0, 384], sizes = [1, 128], strides = [1, 1]} : vector<1x512xf32> to vector<1x128xf32>
    %167 = arith.negf %166 : vector<1x128xf32>
    %168 = math.exp %167 : vector<1x128xf32>
    %cst_29 = arith.constant 1.000000e+00 : f32
    %169 = vector.broadcast %cst_29 : f32 to vector<1x128xf32>
    %170 = arith.addf %169, %168 : vector<1x128xf32>
    %171 = arith.divf %169, %170 : vector<1x128xf32>
    %172 = arith.mulf %163, %150 : vector<1x128xf32>
    %173 = arith.mulf %162, %165 : vector<1x128xf32>
    %174 = arith.addf %172, %173 : vector<1x128xf32>
    %175 = math.tanh %174 : vector<1x128xf32>
    %176 = arith.mulf %171, %175 : vector<1x128xf32>
    %177 = vector.extract_strided_slice %6 {offsets = [7, 0], sizes = [1, 512], strides = [1, 1]} : vector<8x512xf32> to vector<1x512xf32>
    %cst_30 = arith.constant dense<0.000000e+00> : vector<1x512xf32>
    %178 = tpu.matmul %176, %2, %cst_30 {dimension_numbers = #tpu.dot_dimension_numbers<[1], [0], [0], [1], [0, 0, 1, 1], [], []>} : vector<1x128xf32>, vector<128x512xf32>, vector<1x512xf32> -> vector<1x512xf32>
    %179 = arith.addf %177, %178 : vector<1x512xf32>
    %180 = vector.extract_strided_slice %179 {offsets = [0, 0], sizes = [1, 256], strides = [1, 1]} : vector<1x512xf32> to vector<1x256xf32>
    %181 = arith.negf %180 : vector<1x256xf32>
    %182 = math.exp %181 : vector<1x256xf32>
    %cst_31 = arith.constant 1.000000e+00 : f32
    %183 = vector.broadcast %cst_31 : f32 to vector<1x256xf32>
    %184 = arith.addf %183, %182 : vector<1x256xf32>
    %185 = arith.divf %183, %184 : vector<1x256xf32>
    %186 = vector.extract_strided_slice %185 {offsets = [0, 0], sizes = [1, 128], strides = [1, 1]} : vector<1x256xf32> to vector<1x128xf32>
    %187 = vector.extract_strided_slice %185 {offsets = [0, 128], sizes = [1, 128], strides = [1, 1]} : vector<1x256xf32> to vector<1x128xf32>
    %188 = vector.extract_strided_slice %179 {offsets = [0, 256], sizes = [1, 128], strides = [1, 1]} : vector<1x512xf32> to vector<1x128xf32>
    %189 = math.tanh %188 : vector<1x128xf32>
    %190 = vector.extract_strided_slice %179 {offsets = [0, 384], sizes = [1, 128], strides = [1, 1]} : vector<1x512xf32> to vector<1x128xf32>
    %191 = arith.negf %190 : vector<1x128xf32>
    %192 = math.exp %191 : vector<1x128xf32>
    %cst_32 = arith.constant 1.000000e+00 : f32
    %193 = vector.broadcast %cst_32 : f32 to vector<1x128xf32>
    %194 = arith.addf %193, %192 : vector<1x128xf32>
    %195 = arith.divf %193, %194 : vector<1x128xf32>
    %196 = arith.mulf %187, %174 : vector<1x128xf32>
    %197 = arith.mulf %186, %189 : vector<1x128xf32>
    %198 = arith.addf %196, %197 : vector<1x128xf32>
    %199 = math.tanh %198 : vector<1x128xf32>
    %200 = arith.mulf %195, %199 : vector<1x128xf32>
    %c0_33 = arith.constant 0 : index
    %c0_34 = arith.constant 0 : index
    %201 = vector.load %arg4[%c0_33, %c0_34] : memref<128x128xf32, #tpu.memory_space<vmem>>, vector<128x128xf32>
    %cst_35 = arith.constant dense<0.000000e+00> : vector<1x128xf32>
    %202 = tpu.matmul %200, %201, %cst_35 {dimension_numbers = #tpu.dot_dimension_numbers<[1], [0], [0], [1], [0, 0, 1, 1], [], []>} : vector<1x128xf32>, vector<128x128xf32>, vector<1x128xf32> -> vector<1x128xf32>
    %c0_36 = arith.constant 0 : index
    %c0_37 = arith.constant 0 : index
    %203 = vector.load %arg5[%c0_36, %c0_37] : memref<1x128xf32, #tpu.memory_space<vmem>>, vector<1x128xf32>
    %204 = arith.addf %202, %203 : vector<1x128xf32>
    %c0_38 = arith.constant 0 : index
    %c0_39 = arith.constant 0 : index
    %205 = vector.load %arg6[%c0_38, %c0_39] : memref<1x128xf32, #tpu.memory_space<vmem>>, vector<1x128xf32>
    tpu.vector_store %arg6[%c0_38, %c0_39], %204 {strides = array<i32>} : memref<1x128xf32, #tpu.memory_space<vmem>>, vector<1x128xf32>,
    return
  }
}

</mosaic_0001>

<llo_original>
// kernel: tpu_custom_call.1
$region0: #{tpu_custom_call.1}
  #allocation0 [shape = 'u32[]', space=smem, size = 0x4, offset = 0x4, fixed_abs, tag = 'smem constant byte address 0x4 - core index']
  #allocation1 [shape = 'u32[144,128]{1,0:T(1,128)}', space=vmem, size = 0x12000, scoped, tag = 'internal scratch']
  %s0 = inlined_call_operand.hbm [shape: f32[8,16], index: 0, kind: input, shape index: {}]
  %s1 = inlined_call_operand.hbm [shape: f32[16,512], index: 1, kind: input, shape index: {}]
  %s2 = inlined_call_operand.hbm [shape: f32[128,512], index: 2, kind: input, shape index: {}]
  %s3 = inlined_call_operand.vmem [shape: f32[1,512], index: 3, kind: input, shape index: {}]
  %s4 = inlined_call_operand.hbm [shape: f32[128,128], index: 4, kind: input, shape index: {}]
  %s5 = inlined_call_operand.vmem [shape: f32[1,128], index: 5, kind: input, shape index: {}]
  %s6 = inlined_call_operand.hbm [shape: f32[1,128], index: 6, kind: output, shape index: {}]
  %s7 = sld [smem:[#allocation0]]
  $region50: #{tpu_custom_call.1} parent=0
    _
  %s9 = ssub.s32 1, %s7
  %s10 = scalar_select 0, %s9, %s7
  $region1: #{tpu_custom_call.1} parent=0
    #allocation2 [shape = 'u8[4096]{0}', space=vmem, size = 0x1000, scoped, tag = 'input window, operand 0, single buffered']
    #allocation3 [shape = 's32[1]{0}', space=sflag, size = 0x4, scoped, tag = 'scoped memory for tpu_custom_call.1']
    #allocation4 [shape = 's32[1]{0}', space=sflag, size = 0x4, scoped, tag = 'scoped memory for tpu_custom_call.1']
    #allocation5 [shape = 'u8[32768]{0}', space=vmem, size = 0x8000, scoped, tag = 'input window, operand 1, single buffered']
    #allocation6 [shape = 's32[1]{0}', space=sflag, size = 0x4, scoped, tag = 'scoped memory for tpu_custom_call.1']
    #allocation7 [shape = 'u8[262144]{0}', space=vmem, size = 0x40000, scoped, tag = 'input window, operand 2, single buffered']
    #allocation8 [shape = 'u8[65536]{0}', space=vmem, size = 0x10000, scoped, tag = 'input window, operand 4, single buffered']
    #allocation9 [shape = 's32[1]{0}', space=sflag, size = 0x4, scoped, tag = 'scoped memory for tpu_custom_call.1']
    #allocation10 [shape = 'u8[512]{0}', space=vmem, size = 0x400, scoped, tag = 'output window, operand 0, single buffered']
    %11 = vsyncpa [#allocation3], 0
    %12 = vsyncpa [#allocation6], 0
    %13 = vsyncpa [#allocation9], 0
    %14 = vsyncpa [#allocation4], 0
    // Predicated region
    $region2: #{tpu_custom_call.1} parent=1 // pred_check
      _
    $region3: #{tpu_custom_call.1} parent=1 // pred_check_branch
      %16 = sbr.rel (0) target = $region5
    $region4: #{tpu_custom_call.1} parent=1 // pred_region
      %s18 = ssub.s32 128, 128
      %19 = vsyncadd [#allocation3], %s18
      %s21 = sshll.u32 [#allocation2], 4
      %s22 = int_to_ptr.vmem [resolvable:$true] %s21
      %24 = dma.hbm_to_vmem [thread:$0]  %s0, 128, %s22, [#allocation3]
    $region5: #{tpu_custom_call.1} parent=1 // pred_fallthru
      _
    // Predicated region
    $region6: #{tpu_custom_call.1} parent=1 // pred_check
      _
    $region7: #{tpu_custom_call.1} parent=1 // pred_check_branch
      %26 = sbr.rel (0) target = $region9
    $region8: #{tpu_custom_call.1} parent=1 // pred_region
      %s28 = ssub.s32 1024, 1024
      %29 = vsyncadd [#allocation6], %s28
      %s30 = sshll.u32 [#allocation5], 4
      %s31 = int_to_ptr.vmem [resolvable:$true] %s30
      %36 = dma.hbm_to_vmem [thread:$0]  %s1, 1024, %s31, [#allocation6], 512, 512, 32
    $region9: #{tpu_custom_call.1} parent=1 // pred_fallthru
      _
    // Predicated region
    $region10: #{tpu_custom_call.1} parent=1 // pred_check
      _
    $region11: #{tpu_custom_call.1} parent=1 // pred_check_branch
      %38 = sbr.rel (0) target = $region13
    $region12: #{tpu_custom_call.1} parent=1 // pred_region
      %s40 = ssub.s32 8192, 8192
      %41 = vsyncadd [#allocation6], %s40
      %s42 = sshll.u32 [#allocation7], 4
      %s43 = int_to_ptr.vmem [resolvable:$true] %s42
      %48 = dma.hbm_to_vmem [thread:$0]  %s2, 8192, %s43, [#allocation6], 512, 512, 32
    $region13: #{tpu_custom_call.1} parent=1 // pred_fallthru
      _
    // Predicated region
    $region14: #{tpu_custom_call.1} parent=1 // pred_check
      _
    $region15: #{tpu_custom_call.1} parent=1 // pred_check_branch
      %50 = sbr.rel (0) target = $region17
    $region16: #{tpu_custom_call.1} parent=1 // pred_region
      _
    $region17: #{tpu_custom_call.1} parent=1 // pred_fallthru
      _
    // Predicated region
    $region18: #{tpu_custom_call.1} parent=1 // pred_check
      _
    $region19: #{tpu_custom_call.1} parent=1 // pred_check_branch
      %52 = sbr.rel (0) target = $region21
    $region20: #{tpu_custom_call.1} parent=1 // pred_region
      %s54 = ssub.s32 2048, 2048
      %55 = vsyncadd [#allocation9], %s54
      %s56 = sshll.u32 [#allocation8], 4
      %s57 = int_to_ptr.vmem [resolvable:$true] %s56
      %62 = dma.hbm_to_vmem [thread:$0]  %s4, 2048, %s57, [#allocation9], 128, 128, 8
    $region21: #{tpu_custom_call.1} parent=1 // pred_fallthru
      _
    // Predicated region
    $region22: #{tpu_custom_call.1} parent=1 // pred_check
      _
    $region23: #{tpu_custom_call.1} parent=1 // pred_check_branch
      %64 = sbr.rel (0) target = $region25
    $region24: #{tpu_custom_call.1} parent=1 // pred_region
      _
    $region25: #{tpu_custom_call.1} parent=1 // pred_fallthru
      _
    // Predicated region
    $region26: #{tpu_custom_call.1} parent=1 // pred_check
      _
    $region27: #{tpu_custom_call.1} parent=1 // pred_check_branch
      %66 = sbr.rel (0) target = $region29
    $region28: #{tpu_custom_call.1} parent=1 // pred_region
      %67 = dma.done [#allocation3], 128
    $region29: #{tpu_custom_call.1} parent=1 // pred_fallthru
      _
    // Predicated region
    $region30: #{tpu_custom_call.1} parent=1 // pred_check
      _
    $region31: #{tpu_custom_call.1} parent=1 // pred_check_branch
      %69 = sbr.rel (0) target = $region33
    $region32: #{tpu_custom_call.1} parent=1 // pred_region
      %70 = dma.done [#allocation6], 1024
    $region33: #{tpu_custom_call.1} parent=1 // pred_fallthru
      _
    // Predicated region
    $region34: #{tpu_custom_call.1} parent=1 // pred_check
      _
    $region35: #{tpu_custom_call.1} parent=1 // pred_check_branch
      %72 = sbr.rel (0) target = $region37
    $region36: #{tpu_custom_call.1} parent=1 // pred_region
      %73 = dma.done [#allocation6], 8192
    $region37: #{tpu_custom_call.1} parent=1 // pred_fallthru
      _
    // Predicated region
    $region38: #{tpu_custom_call.1} parent=1 // pred_check
      _
    $region39: #{tpu_custom_call.1} parent=1 // pred_check_branch
      %75 = sbr.rel (0) target = $region41
    $region40: #{tpu_custom_call.1} parent=1 // pred_region
      %76 = dma.done [#allocation9], 2048
    $region41: #{tpu_custom_call.1} parent=1 // pred_fallthru
      _
    %v77 = vld [vmem:[#allocation2] sm:$0xff]
    %v78 = vld [vmem:[#allocation5] sm:$0xff]
    %v79 = vld [vmem:[#allocation5 + $0x8] sm:$0xff]
    %v80 = vld [vmem:[#allocation5 + $0x10] sm:$0xff]
    %v81 = vld [vmem:[#allocation5 + $0x18] sm:$0xff]
    %v82 = vld [vmem:[#allocation5 + $0x20] sm:$0xff]
    %v83 = vld [vmem:[#allocation5 + $0x28] sm:$0xff]
    %v84 = vld [vmem:[#allocation5 + $0x30] sm:$0xff]
    %v85 = vld [vmem:[#allocation5 + $0x38] sm:$0xff]
    %v86 = vld [vmem:[#allocation7] sm:$0xff]
    %v87 = vld [vmem:[#allocation7 + $0x8] sm:$0xff]
    %v88 = vld [vmem:[#allocation7 + $0x10] sm:$0xff]
    %v89 = vld [vmem:[#allocation7 + $0x18] sm:$0xff]
    %v90 = vld [vmem:[#allocation7 + $0x20] sm:$0xff]
    %v91 = vld [vmem:[#allocation7 + $0x28] sm:$0xff]
    %v92 = vld [vmem:[#allocation7 + $0x30] sm:$0xff]
    %v93 = vld [vmem:[#allocation7 + $0x38] sm:$0xff]
    %v94 = vld [vmem:[#allocation7 + $0x40] sm:$0xff]
    %v95 = vld [vmem:[#allocation7 + $0x48] sm:$0xff]
    %v96 = vld [vmem:[#allocation7 + $0x50] sm:$0xff]
    %v97 = vld [vmem:[#allocation7 + $0x58] sm:$0xff]
    %v98 = vld [vmem:[#allocation7 + $0x60] sm:$0xff]
    %v99 = vld [vmem:[#allocation7 + $0x68] sm:$0xff]
    %v100 = vld [vmem:[#allocation7 + $0x70] sm:$0xff]
    %v101 = vld [vmem:[#allocation7 + $0x78] sm:$0xff]
    %v102 = vld [vmem:[#allocation7 + $0x80] sm:$0xff]
    %v103 = vld [vmem:[#allocation7 + $0x88] sm:$0xff]
    %v104 = vld [vmem:[#allocation7 + $0x90] sm:$0xff]
    %v105 = vld [vmem:[#allocation7 + $0x98] sm:$0xff]
    %v106 = vld [vmem:[#allocation7 + $0xa0] sm:$0xff]
    %v107 = vld [vmem:[#allocation7 + $0xa8] sm:$0xff]
    %v108 = vld [vmem:[#allocation7 + $0xb0] sm:$0xff]
    %v109 = vld [vmem:[#allocation7 + $0xb8] sm:$0xff]
    %v110 = vld [vmem:[#allocation7 + $0xc0] sm:$0xff]
    %v111 = vld [vmem:[#allocation7 + $0xc8] sm:$0xff]
    %v112 = vld [vmem:[#allocation7 + $0xd0] sm:$0xff]
    %v113 = vld [vmem:[#allocation7 + $0xd8] sm:$0xff]
    %v114 = vld [vmem:[#allocation7 + $0xe0] sm:$0xff]
    %v115 = vld [vmem:[#allocation7 + $0xe8] sm:$0xff]
    %v116 = vld [vmem:[#allocation7 + $0xf0] sm:$0xff]
    %v117 = vld [vmem:[#allocation7 + $0xf8] sm:$0xff]
    %v118 = vld [vmem:[#allocation7 + $0x100] sm:$0xff]
    %v119 = vld [vmem:[#allocation7 + $0x108] sm:$0xff]
    %v120 = vld [vmem:[#allocation7 + $0x110] sm:$0xff]
    %v121 = vld [vmem:[#allocation7 + $0x118] sm:$0xff]
    %v122 = vld [vmem:[#allocation7 + $0x120] sm:$0xff]
    %v123 = vld [vmem:[#allocation7 + $0x128] sm:$0xff]
    %v124 = vld [vmem:[#allocation7 + $0x130] sm:$0xff]
    %v125 = vld [vmem:[#allocation7 + $0x138] sm:$0xff]
    %v126 = vld [vmem:[#allocation7 + $0x140] sm:$0xff]
    %v127 = vld [vmem:[#allocation7 + $0x148] sm:$0xff]
    %v128 = vld [vmem:[#allocation7 + $0x150] sm:$0xff]
    %v129 = vld [vmem:[#allocation7 + $0x158] sm:$0xff]
    %v130 = vld [vmem:[#allocation7 + $0x160] sm:$0xff]
    %v131 = vld [vmem:[#allocation7 + $0x168] sm:$0xff]
    %v132 = vld [vmem:[#allocation7 + $0x170] sm:$0xff]
    %v133 = vld [vmem:[#allocation7 + $0x178] sm:$0xff]
    %v134 = vld [vmem:[#allocation7 + $0x180] sm:$0xff]
    %v135 = vld [vmem:[#allocation7 + $0x188] sm:$0xff]
    %v136 = vld [vmem:[#allocation7 + $0x190] sm:$0xff]
    %v137 = vld [vmem:[#allocation7 + $0x198] sm:$0xff]
    %v138 = vld [vmem:[#allocation7 + $0x1a0] sm:$0xff]
    %v139 = vld [vmem:[#allocation7 + $0x1a8] sm:$0xff]
    %v140 = vld [vmem:[#allocation7 + $0x1b0] sm:$0xff]
    %v141 = vld [vmem:[#allocation7 + $0x1b8] sm:$0xff]
    %v142 = vld [vmem:[#allocation7 + $0x1c0] sm:$0xff]
    %v143 = vld [vmem:[#allocation7 + $0x1c8] sm:$0xff]
    %v144 = vld [vmem:[#allocation7 + $0x1d0] sm:$0xff]
    %v145 = vld [vmem:[#allocation7 + $0x1d8] sm:$0xff]
    %v146 = vld [vmem:[#allocation7 + $0x1e0] sm:$0xff]
    %v147 = vld [vmem:[#allocation7 + $0x1e8] sm:$0xff]
    %v148 = vld [vmem:[#allocation7 + $0x1f0] sm:$0xff]
    %v149 = vld [vmem:[#allocation7 + $0x1f8] sm:$0xff]
    %v150 = vld [vmem:[%s3] sm:$0xf]
    %v152 = vlaneseq
    %v153 = vshrl.u32 %v152, 7
    %v154 = vsub.s32 0, %v153
    %v155 = vrot.slane %v150, %v154
    %v156 = vlaneseq
    %v157 = vshrl.u32 %v156, 7
    %v158 = vsub.s32 1, %v157
    %v159 = vrot.slane %v150, %v158
    %v160 = vlaneseq
    %v161 = vshrl.u32 %v160, 7
    %v162 = vsub.s32 2, %v161
    %v163 = vrot.slane %v150, %v162
    %v164 = vlaneseq
    %v165 = vshrl.u32 %v164, 7
    %v166 = vsub.s32 3, %v165
    %v167 = vrot.slane %v150, %v166
    %vm172 = vcmask 130048
    %v174 = vsel %vm172, %v77, 0
    %176 = vmatprep.subr.mxu0 %v79
    %177 = vmatpush1.msra.mxu0 %v78
    %178 = vmatprep.subr.mxu0 %v83
    %179 = vmatpush1.msra.mxu0 %v82
    %180 = vmatprep.subr.mxu0 0.0
    %181 = vmatpush1.msra.mxu0 0.0
    %182 = vmatprep.subr.mxu0 0.0
    %183 = vmatpush1.msra.mxu0 0.0
    %184 = vmatprep.subr.mxu0 0.0
    %185 = vmatpush1.msra.mxu0 0.0
    %186 = vmatprep.subr.mxu0 0.0
    %187 = vmatpush1.msra.mxu0 0.0
    %188 = vmatprep.subr.mxu0 0.0
    %189 = vmatpush1.msra.mxu0 0.0
    %190 = vmatprep.subr.mxu0 0.0
    %191 = vmatpush1.msra.mxu0 0.0
    %192 = vmatprep.subr.mxu0 0.0
    %193 = vmatpush1.msra.mxu0 0.0
    %194 = vmatprep.subr.mxu0 0.0
    %195 = vmatpush1.msra.mxu0 0.0
    %196 = vmatprep.subr.mxu0 0.0
    %197 = vmatpush1.msra.mxu0 0.0
    %198 = vmatprep.subr.mxu0 0.0
    %199 = vmatpush1.msra.mxu0 0.0
    %200 = vmatprep.subr.mxu0 0.0
    %201 = vmatpush1.msra.mxu0 0.0
    %202 = vmatprep.subr.mxu0 0.0
    %203 = vmatpush1.msra.mxu0 0.0
    %204 = vmatprep.subr.mxu0 0.0
    %205 = vmatpush1.msra.mxu0 0.0
    %206 = vmatprep.subr.mxu0 0.0
    %207 = vmatpush1.msra.mxu0 0.0
    %208 = vmatprep.subr.mxu0 0.0
    %209 = vmatpush1.msra.mxu0 0.0
    %210 = vmatprep.subr.mxu0 0.0
    %211 = vmatpush1.msra.mxu0 0.0
    %212 = vmatprep.subr.mxu0 0.0
    %213 = vmatpush1.msra.mxu0 0.0
    %214 = vmatprep.subr.mxu0 0.0
    %215 = vmatpush1.msra.mxu0 0.0
    %216 = vmatprep.subr.mxu0 0.0
    %217 = vmatpush1.msra.mxu0 0.0
    %218 = vmatprep.subr.mxu0 0.0
    %219 = vmatpush1.msra.mxu0 0.0
    %220 = vmatprep.subr.mxu0 0.0
    %221 = vmatpush1.msra.mxu0 0.0
    %222 = vmatprep.subr.mxu0 0.0
    %223 = vmatpush1.msra.mxu0 0.0
    %224 = vmatprep.subr.mxu0 0.0
    %225 = vmatpush1.msra.mxu0 0.0
    %226 = vmatprep.subr.mxu0 0.0
    %227 = vmatpush1.msra.mxu0 0.0
    %228 = vmatprep.subr.mxu0 0.0
    %229 = vmatpush1.msra.mxu0 0.0
    %230 = vmatprep.subr.mxu0 0.0
    %231 = vmatpush1.msra.mxu0 0.0
    %232 = vmatprep.subr.mxu0 0.0
    %233 = vmatpush1.msra.mxu0 0.0
    %234 = vmatprep.subr.mxu0 0.0
    %235 = vmatpush1.msra.mxu0 0.0
    %236 = vmatprep.subr.mxu0 0.0
    %237 = vmatpush1.msra.mxu0 0.0
    %238 = vmatprep.subr.mxu0 0.0
    %239 = vmatpush1.msra.mxu0 0.0
    %240 = vmatprep.mubr.f32.mxu0 0.0
    %241 = vmatmul.mubr.f32.gmra.mrb[0].mxu0 %v174
    %v242 = vpop.f32.mrb[0].mxu0
    %v243 = vadd.f32 %v155, %v242
    %v244 = vpop.f32.mrb[0].mxu0
    %v245 = vadd.f32 %v159, %v244
    %246 = vdwg.mxu0
    %247 = vmatprep.subr.mxu0 %v81
    %248 = vmatpush1.msra.mxu0 %v80
    %249 = vmatprep.subr.mxu0 %v85
    %250 = vmatpush1.msra.mxu0 %v84
    %251 = vmatprep.subr.mxu0 0.0
    %252 = vmatpush1.msra.mxu0 0.0
    %253 = vmatprep.subr.mxu0 0.0
    %254 = vmatpush1.msra.mxu0 0.0
    %255 = vmatprep.subr.mxu0 0.0
    %256 = vmatpush1.msra.mxu0 0.0
    %257 = vmatprep.subr.mxu0 0.0
    %258 = vmatpush1.msra.mxu0 0.0
    %259 = vmatprep.subr.mxu0 0.0
    %260 = vmatpush1.msra.mxu0 0.0
    %261 = vmatprep.subr.mxu0 0.0
    %262 = vmatpush1.msra.mxu0 0.0
    %263 = vmatprep.subr.mxu0 0.0
    %264 = vmatpush1.msra.mxu0 0.0
    %265 = vmatprep.subr.mxu0 0.0
    %266 = vmatpush1.msra.mxu0 0.0
    %267 = vmatprep.subr.mxu0 0.0
    %268 = vmatpush1.msra.mxu0 0.0
    %269 = vmatprep.subr.mxu0 0.0
    %270 = vmatpush1.msra.mxu0 0.0
    %271 = vmatprep.subr.mxu0 0.0
    %272 = vmatpush1.msra.mxu0 0.0
    %273 = vmatprep.subr.mxu0 0.0
    %274 = vmatpush1.msra.mxu0 0.0
    %275 = vmatprep.subr.mxu0 0.0
    %276 = vmatpush1.msra.mxu0 0.0
    %277 = vmatprep.subr.mxu0 0.0
    %278 = vmatpush1.msra.mxu0 0.0
    %279 = vmatprep.subr.mxu0 0.0
    %280 = vmatpush1.msra.mxu0 0.0
    %281 = vmatprep.subr.mxu0 0.0
    %282 = vmatpush1.msra.mxu0 0.0
    %283 = vmatprep.subr.mxu0 0.0
    %284 = vmatpush1.msra.mxu0 0.0
    %285 = vmatprep.subr.mxu0 0.0
    %286 = vmatpush1.msra.mxu0 0.0
    %287 = vmatprep.subr.mxu0 0.0
    %288 = vmatpush1.msra.mxu0 0.0
    %289 = vmatprep.subr.mxu0 0.0
    %290 = vmatpush1.msra.mxu0 0.0
    %291 = vmatprep.subr.mxu0 0.0
    %292 = vmatpush1.msra.mxu0 0.0
    %293 = vmatprep.subr.mxu0 0.0
    %294 = vmatpush1.msra.mxu0 0.0
    %295 = vmatprep.subr.mxu0 0.0
    %296 = vmatpush1.msra.mxu0 0.0
    %297 = vmatprep.subr.mxu0 0.0
    %298 = vmatpush1.msra.mxu0 0.0
    %299 = vmatprep.subr.mxu0 0.0
    %300 = vmatpush1.msra.mxu0 0.0
    %301 = vmatprep.subr.mxu0 0.0
    %302 = vmatpush1.msra.mxu0 0.0
    %303 = vmatprep.subr.mxu0 0.0
    %304 = vmatpush1.msra.mxu0 0.0
    %305 = vmatprep.subr.mxu0 0.0
    %306 = vmatpush1.msra.mxu0 0.0
    %307 = vmatprep.subr.mxu0 0.0
    %308 = vmatpush1.msra.mxu0 0.0
    %309 = vmatprep.subr.mxu0 0.0
    %310 = vmatpush1.msra.mxu0 0.0
    %311 = vmatprep.mubr.f32.mxu0 0.0
    %312 = vmatmul.mubr.f32.gmra.mrb[0].mxu0 %v174
    %v313 = vpop.f32.mrb[0].mxu0
    %v314 = vadd.f32 %v163, %v313
    %v315 = vpop.f32.mrb[0].mxu0
    %v316 = vadd.f32 %v167, %v315
    %317 = vdwg.mxu0
    %318 = vmatprep.subr.mxu0 %v87
    %319 = vmatpush1.msra.mxu0 %v86
    %320 = vmatprep.subr.mxu0 %v91
    %321 = vmatpush1.msra.mxu0 %v90
    %322 = vmatprep.subr.mxu0 %v95
    %323 = vmatpush1.msra.mxu0 %v94
    %324 = vmatprep.subr.mxu0 %v99
    %325 = vmatpush1.msra.mxu0 %v98
    %326 = vmatprep.subr.mxu0 %v103
    %327 = vmatpush1.msra.mxu0 %v102
    %328 = vmatprep.subr.mxu0 %v107
    %329 = vmatpush1.msra.mxu0 %v106
    %330 = vmatprep.subr.mxu0 %v111
    %331 = vmatpush1.msra.mxu0 %v110
    %332 = vmatprep.subr.mxu0 %v115
    %333 = vmatpush1.msra.mxu0 %v114
    %334 = vmatprep.subr.mxu0 %v119
    %335 = vmatpush1.msra.mxu0 %v118
    %336 = vmatprep.subr.mxu0 %v123
    %337 = vmatpush1.msra.mxu0 %v122
    %338 = vmatprep.subr.mxu0 %v127
    %339 = vmatpush1.msra.mxu0 %v126
    %340 = vmatprep.subr.mxu0 %v131
    %341 = vmatpush1.msra.mxu0 %v130
    %342 = vmatprep.subr.mxu0 %v135
    %343 = vmatpush1.msra.mxu0 %v134
    %344 = vmatprep.subr.mxu0 %v139
    %345 = vmatpush1.msra.mxu0 %v138
    %346 = vmatprep.subr.mxu0 %v143
    %347 = vmatpush1.msra.mxu0 %v142
    %348 = vmatprep.subr.mxu0 %v147
    %349 = vmatpush1.msra.mxu0 %v146
    %350 = vmatprep.subr.mxu0 0.0
    %351 = vmatpush1.msra.mxu0 0.0
    %352 = vmatprep.subr.mxu0 0.0
    %353 = vmatpush1.msra.mxu0 0.0
    %354 = vmatprep.subr.mxu0 0.0
    %355 = vmatpush1.msra.mxu0 0.0
    %356 = vmatprep.subr.mxu0 0.0
    %357 = vmatpush1.msra.mxu0 0.0
    %358 = vmatprep.subr.mxu0 0.0
    %359 = vmatpush1.msra.mxu0 0.0
    %360 = vmatprep.subr.mxu0 0.0
    %361 = vmatpush1.msra.mxu0 0.0
    %362 = vmatprep.subr.mxu0 0.0
    %363 = vmatpush1.msra.mxu0 0.0
    %364 = vmatprep.subr.mxu0 0.0
    %365 = vmatpush1.msra.mxu0 0.0
    %366 = vmatprep.subr.mxu0 0.0
    %367 = vmatpush1.msra.mxu0 0.0
    %368 = vmatprep.subr.mxu0 0.0
    %369 = vmatpush1.msra.mxu0 0.0
    %370 = vmatprep.subr.mxu0 0.0
    %371 = vmatpush1.msra.mxu0 0.0
    %372 = vmatprep.subr.mxu0 0.0
    %373 = vmatpush1.msra.mxu0 0.0
    %374 = vmatprep.subr.mxu0 0.0
    %375 = vmatpush1.msra.mxu0 0.0
    %376 = vmatprep.subr.mxu0 0.0
    %377 = vmatpush1.msra.mxu0 0.0
    %378 = vmatprep.subr.mxu0 0.0
    %379 = vmatpush1.msra.mxu0 0.0
    %380 = vmatprep.subr.mxu0 0.0
    %381 = vmatpush1.msra.mxu0 0.0
    %382 = vmatprep.mubr.f32.mxu0 0.0
    %383 = vmatmul.mubr.f32.gmra.mrb[0].mxu0 0.0
    %v384 = vpop.f32.mrb[0].mxu0
    %v385 = vadd.f32 0.0, %v384
    %v386 = vpop.f32.mrb[0].mxu0
    %v387 = vadd.f32 0.0, %v386
    %388 = vdwg.mxu0
    %389 = vmatprep.subr.mxu0 %v89
    %390 = vmatpush1.msra.mxu0 %v88
    %391 = vmatprep.subr.mxu0 %v93
    %392 = vmatpush1.msra.mxu0 %v92
    %393 = vmatprep.subr.mxu0 %v97
    %394 = vmatpush1.msra.mxu0 %v96
    %395 = vmatprep.subr.mxu0 %v101
    %396 = vmatpush1.msra.mxu0 %v100
    %397 = vmatprep.subr.mxu0 %v105
    %398 = vmatpush1.msra.mxu0 %v104
    %399 = vmatprep.subr.mxu0 %v109
    %400 = vmatpush1.msra.mxu0 %v108
    %401 = vmatprep.subr.mxu0 %v113
    %402 = vmatpush1.msra.mxu0 %v112
    %403 = vmatprep.subr.mxu0 %v117
    %404 = vmatpush1.msra.mxu0 %v116
    %405 = vmatprep.subr.mxu0 %v121
    %406 = vmatpush1.msra.mxu0 %v120
    %407 = vmatprep.subr.mxu0 %v125
    %408 = vmatpush1.msra.mxu0 %v124
    %409 = vmatprep.subr.mxu0 %v129
    %410 = vmatpush1.msra.mxu0 %v128
    %411 = vmatprep.subr.mxu0 %v133
    %412 = vmatpush1.msra.mxu0 %v132
    %413 = vmatprep.subr.mxu0 %v137
    %414 = vmatpush1.msra.mxu0 %v136
    %415 = vmatprep.subr.mxu0 %v141
    %416 = vmatpush1.msra.mxu0 %v140
    %417 = vmatprep.subr.mxu0 %v145
    %418 = vmatpush1.msra.mxu0 %v144
    %419 = vmatprep.subr.mxu0 %v149
    %420 = vmatpush1.msra.mxu0 %v148
    %421 = vmatprep.subr.mxu0 0.0
    %422 = vmatpush1.msra.mxu0 0.0
    %423 = vmatprep.subr.mxu0 0.0
    %424 = vmatpush1.msra.mxu0 0.0
    %425 = vmatprep.subr.mxu0 0.0
    %426 = vmatpush1.msra.mxu0 0.0
    %427 = vmatprep.subr.mxu0 0.0
    %428 = vmatpush1.msra.mxu0 0.0
    %429 = vmatprep.subr.mxu0 0.0
    %430 = vmatpush1.msra.mxu0 0.0
    %431 = vmatprep.subr.mxu0 0.0
    %432 = vmatpush1.msra.mxu0 0.0
    %433 = vmatprep.subr.mxu0 0.0
    %434 = vmatpush1.msra.mxu0 0.0
    %435 = vmatprep.subr.mxu0 0.0
    %436 = vmatpush1.msra.mxu0 0.0
    %437 = vmatprep.subr.mxu0 0.0
    %438 = vmatpush1.msra.mxu0 0.0
    %439 = vmatprep.subr.mxu0 0.0
    %440 = vmatpush1.msra.mxu0 0.0
    %441 = vmatprep.subr.mxu0 0.0
    %442 = vmatpush1.msra.mxu0 0.0
    %443 = vmatprep.subr.mxu0 0.0
    %444 = vmatpush1.msra.mxu0 0.0
    %445 = vmatprep.subr.mxu0 0.0
    %446 = vmatpush1.msra.mxu0 0.0
    %447 = vmatprep.subr.mxu0 0.0
    %448 = vmatpush1.msra.mxu0 0.0
    %449 = vmatprep.subr.mxu0 0.0
    %450 = vmatpush1.msra.mxu0 0.0
    %451 = vmatprep.subr.mxu0 0.0
    %452 = vmatpush1.msra.mxu0 0.0
    %453 = vmatprep.mubr.f32.mxu0 0.0
    %454 = vmatmul.mubr.f32.gmra.mrb[0].mxu0 0.0
    %v455 = vpop.f32.mrb[0].mxu0
    %v456 = vadd.f32 0.0, %v455
    %v457 = vpop.f32.mrb[0].mxu0
    %v458 = vadd.f32 0.0, %v457
    %459 = vdwg.mxu0
    %v460 = vadd.f32 %v243, %v385
    %v461 = vadd.f32 %v245, %v387
    %v462 = vadd.f32 %v314, %v456
    %v463 = vadd.f32 %v316, %v458
    %v464 = vxor.u32 %v460, 2147483648
    %v465 = vxor.u32 %v461, 2147483648
    %v466 = vmul.f32 %v464, 1.442695
    %v467 = vpow.pop %v466
    %v468 = vmul.f32 %v465, 1.442695
    %v469 = vpow.pop %v468
    %v470 = vadd.f32 %v467, 1.0
    %v471 = vadd.f32 %v469, 1.0
    %v472 = vrcp.pop %v470
    %v473 = vmul.f32 1.0, %v472
    %v474 = vrcp.pop %v471
    %v475 = vmul.f32 1.0, %v474
    %v476 = vtanh.pop %v462
    %v477 = vxor.u32 %v463, 2147483648
    %v478 = vmul.f32 %v477, 1.442695
    %v479 = vpow.pop %v478
    %v480 = vadd.f32 %v479, 1.0
    %v481 = vrcp.pop %v480
    %v482 = vmul.f32 1.0, %v481
    %v483 = vmul.f32 %v475, 0.0
    %v484 = vmul.f32 %v473, %v476
    %v485 = vadd.f32 %v483, %v484
    %v486 = vtanh.pop %v485
    %v487 = vmul.f32 %v482, %v486
    %488 = vmatprep.subr.mxu0 %v87
    %489 = vmatpush1.msra.mxu0 %v86
    %490 = vmatprep.subr.mxu0 %v91
    %491 = vmatpush1.msra.mxu0 %v90
    %492 = vmatprep.subr.mxu0 %v95
    %493 = vmatpush1.msra.mxu0 %v94
    %494 = vmatprep.subr.mxu0 %v99
    %495 = vmatpush1.msra.mxu0 %v98
    %496 = vmatprep.subr.mxu0 %v103
    %497 = vmatpush1.msra.mxu0 %v102
    %498 = vmatprep.subr.mxu0 %v107
    %499 = vmatpush1.msra.mxu0 %v106
    %500 = vmatprep.subr.mxu0 %v111
    %501 = vmatpush1.msra.mxu0 %v110
    %502 = vmatprep.subr.mxu0 %v115
    %503 = vmatpush1.msra.mxu0 %v114
    %504 = vmatprep.subr.mxu0 %v119
    %505 = vmatpush1.msra.mxu0 %v118
    %506 = vmatprep.subr.mxu0 %v123
    %507 = vmatpush1.msra.mxu0 %v122
    %508 = vmatprep.subr.mxu0 %v127
    %509 = vmatpush1.msra.mxu0 %v126
    %510 = vmatprep.subr.mxu0 %v131
    %511 = vmatpush1.msra.mxu0 %v130
    %512 = vmatprep.subr.mxu0 %v135
    %513 = vmatpush1.msra.mxu0 %v134
    %514 = vmatprep.subr.mxu0 %v139
    %515 = vmatpush1.msra.mxu0 %v138
    %516 = vmatprep.subr.mxu0 %v143
    %517 = vmatpush1.msra.mxu0 %v142
    %518 = vmatprep.subr.mxu0 %v147
    %519 = vmatpush1.msra.mxu0 %v146
    %520 = vmatprep.subr.mxu0 0.0
    %521 = vmatpush1.msra.mxu0 0.0
    %522 = vmatprep.subr.mxu0 0.0
    %523 = vmatpush1.msra.mxu0 0.0
    %524 = vmatprep.subr.mxu0 0.0
    %525 = vmatpush1.msra.mxu0 0.0
    %526 = vmatprep.subr.mxu0 0.0
    %527 = vmatpush1.msra.mxu0 0.0
    %528 = vmatprep.subr.mxu0 0.0
    %529 = vmatpush1.msra.mxu0 0.0
    %530 = vmatprep.subr.mxu0 0.0
    %531 = vmatpush1.msra.mxu0 0.0
    %532 = vmatprep.subr.mxu0 0.0
    %533 = vmatpush1.msra.mxu0 0.0
    %534 = vmatprep.subr.mxu0 0.0
    %535 = vmatpush1.msra.mxu0 0.0
    %536 = vmatprep.subr.mxu0 0.0
    %537 = vmatpush1.msra.mxu0 0.0
    %538 = vmatprep.subr.mxu0 0.0
    %539 = vmatpush1.msra.mxu0 0.0
    %540 = vmatprep.subr.mxu0 0.0
    %541 = vmatpush1.msra.mxu0 0.0
    %542 = vmatprep.subr.mxu0 0.0
    %543 = vmatpush1.msra.mxu0 0.0
    %544 = vmatprep.subr.mxu0 0.0
    %545 = vmatpush1.msra.mxu0 0.0
    %546 = vmatprep.subr.mxu0 0.0
    %547 = vmatpush1.msra.mxu0 0.0
    %548 = vmatprep.subr.mxu0 0.0
    %549 = vmatpush1.msra.mxu0 0.0
    %550 = vmatprep.subr.mxu0 0.0
    %551 = vmatpush1.msra.mxu0 0.0
    %552 = vmatprep.mubr.f32.mxu0 0.0
    %553 = vmatmul.mubr.f32.gmra.mrb[0].mxu0 %v487
    %v554 = vpop.f32.mrb[0].mxu0
    %v555 = vadd.f32 0.0, %v554
    %v556 = vpop.f32.mrb[0].mxu0
    %v557 = vadd.f32 0.0, %v556
    %558 = vdwg.mxu0
    %559 = vmatprep.subr.mxu0 %v89
    %560 = vmatpush1.msra.mxu0 %v88
    %561 = vmatprep.subr.mxu0 %v93
    %562 = vmatpush1.msra.mxu0 %v92
    %563 = vmatprep.subr.mxu0 %v97
    %564 = vmatpush1.msra.mxu0 %v96
    %565 = vmatprep.subr.mxu0 %v101
    %566 = vmatpush1.msra.mxu0 %v100
    %567 = vmatprep.subr.mxu0 %v105
    %568 = vmatpush1.msra.mxu0 %v104
    %569 = vmatprep.subr.mxu0 %v109
    %570 = vmatpush1.msra.mxu0 %v108
    %571 = vmatprep.subr.mxu0 %v113
    %572 = vmatpush1.msra.mxu0 %v112
    %573 = vmatprep.subr.mxu0 %v117
    %574 = vmatpush1.msra.mxu0 %v116
    %575 = vmatprep.subr.mxu0 %v121
    %576 = vmatpush1.msra.mxu0 %v120
    %577 = vmatprep.subr.mxu0 %v125
    %578 = vmatpush1.msra.mxu0 %v124
    %579 = vmatprep.subr.mxu0 %v129
    %580 = vmatpush1.msra.mxu0 %v128
    %581 = vmatprep.subr.mxu0 %v133
    %582 = vmatpush1.msra.mxu0 %v132
    %583 = vmatprep.subr.mxu0 %v137
    %584 = vmatpush1.msra.mxu0 %v136
    %585 = vmatprep.subr.mxu0 %v141
    %586 = vmatpush1.msra.mxu0 %v140
    %587 = vmatprep.subr.mxu0 %v145
    %588 = vmatpush1.msra.mxu0 %v144
    %589 = vmatprep.subr.mxu0 %v149
    %590 = vmatpush1.msra.mxu0 %v148
    %591 = vmatprep.subr.mxu0 0.0
    %592 = vmatpush1.msra.mxu0 0.0
    %593 = vmatprep.subr.mxu0 0.0
    %594 = vmatpush1.msra.mxu0 0.0
    %595 = vmatprep.subr.mxu0 0.0
    %596 = vmatpush1.msra.mxu0 0.0
    %597 = vmatprep.subr.mxu0 0.0
    %598 = vmatpush1.msra.mxu0 0.0
    %599 = vmatprep.subr.mxu0 0.0
    %600 = vmatpush1.msra.mxu0 0.0
    %601 = vmatprep.subr.mxu0 0.0
    %602 = vmatpush1.msra.mxu0 0.0
    %603 = vmatprep.subr.mxu0 0.0
    %604 = vmatpush1.msra.mxu0 0.0
    %605 = vmatprep.subr.mxu0 0.0
    %606 = vmatpush1.msra.mxu0 0.0
    %607 = vmatprep.subr.mxu0 0.0
    %608 = vmatpush1.msra.mxu0 0.0
    %609 = vmatprep.subr.mxu0 0.0
    %610 = vmatpush1.msra.mxu0 0.0
    %611 = vmatprep.subr.mxu0 0.0
    %612 = vmatpush1.msra.mxu0 0.0
    %613 = vmatprep.subr.mxu0 0.0
    %614 = vmatpush1.msra.mxu0 0.0
    %615 = vmatprep.subr.mxu0 0.0
    %616 = vmatpush1.msra.mxu0 0.0
    %617 = vmatprep.subr.mxu0 0.0
    %618 = vmatpush1.msra.mxu0 0.0
    %619 = vmatprep.subr.mxu0 0.0
    %620 = vmatpush1.msra.mxu0 0.0
    %621 = vmatprep.subr.mxu0 0.0
    %622 = vmatpush1.msra.mxu0 0.0
    %623 = vmatprep.mubr.f32.mxu0 0.0
    %624 = vmatmul.mubr.f32.gmra.mrb[0].mxu0 %v487
    %v625 = vpop.f32.mrb[0].mxu0
    %v626 = vadd.f32 0.0, %v625
    %v627 = vpop.f32.mrb[0].mxu0
    %v628 = vadd.f32 0.0, %v627
    %629 = vdwg.mxu0
    %v634 = vrot.slane %v555, 7
    %v635 = vrot.slane %v557, 7
    %v636 = vrot.slane %v626, 7
    %v637 = vrot.slane %v628, 7
    %v642 = vadd.f32 %v243, %v634
    %v643 = vadd.f32 %v245, %v635
    %v644 = vadd.f32 %v314, %v636
    %v645 = vadd.f32 %v316, %v637
    %v646 = vxor.u32 %v642, 2147483648
    %v647 = vxor.u32 %v643, 2147483648
    %v648 = vmul.f32 %v646, 1.442695
    %v649 = vpow.pop %v648
    %v650 = vmul.f32 %v647, 1.442695
    %v651 = vpow.pop %v650
    %v652 = vadd.f32 %v649, 1.0
    %v653 = vadd.f32 %v651, 1.0
    %v654 = vrcp.pop %v652
    %v655 = vmul.f32 1.0, %v654
    %v656 = vrcp.pop %v653
    %v657 = vmul.f32 1.0, %v656
    %v658 = vtanh.pop %v644
    %v659 = vxor.u32 %v645, 2147483648
    %v660 = vmul.f32 %v659, 1.442695
    %v661 = vpow.pop %v660
    %v662 = vadd.f32 %v661, 1.0
    %v663 = vrcp.pop %v662
    %v664 = vmul.f32 1.0, %v663
    %v666 = vrot.slane %v485, 7
    %v668 = vmul.f32 %v657, %v666
    %v669 = vmul.f32 %v655, %v658
    %v670 = vadd.f32 %v668, %v669
    %v671 = vtanh.pop %v670
    %v672 = vmul.f32 %v664, %v671
    %v674 = vrot.slane %v672, 1
    %676 = vmatprep.subr.mxu0 %v87
    %677 = vmatpush1.msra.mxu0 %v86
    %678 = vmatprep.subr.mxu0 %v91
    %679 = vmatpush1.msra.mxu0 %v90
    %680 = vmatprep.subr.mxu0 %v95
    %681 = vmatpush1.msra.mxu0 %v94
    %682 = vmatprep.subr.mxu0 %v99
    %683 = vmatpush1.msra.mxu0 %v98
    %684 = vmatprep.subr.mxu0 %v103
    %685 = vmatpush1.msra.mxu0 %v102
    %686 = vmatprep.subr.mxu0 %v107
    %687 = vmatpush1.msra.mxu0 %v106
    %688 = vmatprep.subr.mxu0 %v111
    %689 = vmatpush1.msra.mxu0 %v110
    %690 = vmatprep.subr.mxu0 %v115
    %691 = vmatpush1.msra.mxu0 %v114
    %692 = vmatprep.subr.mxu0 %v119
    %693 = vmatpush1.msra.mxu0 %v118
    %694 = vmatprep.subr.mxu0 %v123
    %695 = vmatpush1.msra.mxu0 %v122
    %696 = vmatprep.subr.mxu0 %v127
    %697 = vmatpush1.msra.mxu0 %v126
    %698 = vmatprep.subr.mxu0 %v131
    %699 = vmatpush1.msra.mxu0 %v130
    %700 = vmatprep.subr.mxu0 %v135
    %701 = vmatpush1.msra.mxu0 %v134
    %702 = vmatprep.subr.mxu0 %v139
    %703 = vmatpush1.msra.mxu0 %v138
    %704 = vmatprep.subr.mxu0 %v143
    %705 = vmatpush1.msra.mxu0 %v142
    %706 = vmatprep.subr.mxu0 %v147
    %707 = vmatpush1.msra.mxu0 %v146
    %708 = vmatprep.subr.mxu0 0.0
    %709 = vmatpush1.msra.mxu0 0.0
    %710 = vmatprep.subr.mxu0 0.0
    %711 = vmatpush1.msra.mxu0 0.0
    %712 = vmatprep.subr.mxu0 0.0
    %713 = vmatpush1.msra.mxu0 0.0
    %714 = vmatprep.subr.mxu0 0.0
    %715 = vmatpush1.msra.mxu0 0.0
    %716 = vmatprep.subr.mxu0 0.0
    %717 = vmatpush1.msra.mxu0 0.0
    %718 = vmatprep.subr.mxu0 0.0
    %719 = vmatpush1.msra.mxu0 0.0
    %720 = vmatprep.subr.mxu0 0.0
    %721 = vmatpush1.msra.mxu0 0.0
    %722 = vmatprep.subr.mxu0 0.0
    %723 = vmatpush1.msra.mxu0 0.0
    %724 = vmatprep.subr.mxu0 0.0
    %725 = vmatpush1.msra.mxu0 0.0
    %726 = vmatprep.subr.mxu0 0.0
    %727 = vmatpush1.msra.mxu0 0.0
    %728 = vmatprep.subr.mxu0 0.0
    %729 = vmatpush1.msra.mxu0 0.0
    %730 = vmatprep.subr.mxu0 0.0
    %731 = vmatpush1.msra.mxu0 0.0
    %732 = vmatprep.subr.mxu0 0.0
    %733 = vmatpush1.msra.mxu0 0.0
    %734 = vmatprep.subr.mxu0 0.0
    %735 = vmatpush1.msra.mxu0 0.0
    %736 = vmatprep.subr.mxu0 0.0
    %737 = vmatpush1.msra.mxu0 0.0
    %738 = vmatprep.subr.mxu0 0.0
    %739 = vmatpush1.msra.mxu0 0.0
    %740 = vmatprep.mubr.f32.mxu0 0.0
    %741 = vmatmul.mubr.f32.gmra.mrb[0].mxu0 %v674
    %v742 = vpop.f32.mrb[0].mxu0
    %v743 = vadd.f32 0.0, %v742
    %v744 = vpop.f32.mrb[0].mxu0
    %v745 = vadd.f32 0.0, %v744
    %746 = vdwg.mxu0
    %747 = vmatprep.subr.mxu0 %v89
    %748 = vmatpush1.msra.mxu0 %v88
    %749 = vmatprep.subr.mxu0 %v93
    %750 = vmatpush1.msra.mxu0 %v92
    %751 = vmatprep.subr.mxu0 %v97
    %752 = vmatpush1.msra.mxu0 %v96
    %753 = vmatprep.subr.mxu0 %v101
    %754 = vmatpush1.msra.mxu0 %v100
    %755 = vmatprep.subr.mxu0 %v105
    %756 = vmatpush1.msra.mxu0 %v104
    %757 = vmatprep.subr.mxu0 %v109
    %758 = vmatpush1.msra.mxu0 %v108
    %759 = vmatprep.subr.mxu0 %v113
    %760 = vmatpush1.msra.mxu0 %v112
    %761 = vmatprep.subr.mxu0 %v117
    %762 = vmatpush1.msra.mxu0 %v116
    %763 = vmatprep.subr.mxu0 %v121
    %764 = vmatpush1.msra.mxu0 %v120
    %765 = vmatprep.subr.mxu0 %v125
    %766 = vmatpush1.msra.mxu0 %v124
    %767 = vmatprep.subr.mxu0 %v129
    %768 = vmatpush1.msra.mxu0 %v128
    %769 = vmatprep.subr.mxu0 %v133
    %770 = vmatpush1.msra.mxu0 %v132
    %771 = vmatprep.subr.mxu0 %v137
    %772 = vmatpush1.msra.mxu0 %v136
    %773 = vmatprep.subr.mxu0 %v141
    %774 = vmatpush1.msra.mxu0 %v140
    %775 = vmatprep.subr.mxu0 %v145
    %776 = vmatpush1.msra.mxu0 %v144
    %777 = vmatprep.subr.mxu0 %v149
    %778 = vmatpush1.msra.mxu0 %v148
    %779 = vmatprep.subr.mxu0 0.0
    %780 = vmatpush1.msra.mxu0 0.0
    %781 = vmatprep.subr.mxu0 0.0
    %782 = vmatpush1.msra.mxu0 0.0
    %783 = vmatprep.subr.mxu0 0.0
    %784 = vmatpush1.msra.mxu0 0.0
    %785 = vmatprep.subr.mxu0 0.0
    %786 = vmatpush1.msra.mxu0 0.0
    %787 = vmatprep.subr.mxu0 0.0
    %788 = vmatpush1.msra.mxu0 0.0
    %789 = vmatprep.subr.mxu0 0.0
    %790 = vmatpush1.msra.mxu0 0.0
    %791 = vmatprep.subr.mxu0 0.0
    %792 = vmatpush1.msra.mxu0 0.0
    %793 = vmatprep.subr.mxu0 0.0
    %794 = vmatpush1.msra.mxu0 0.0
    %795 = vmatprep.subr.mxu0 0.0
    %796 = vmatpush1.msra.mxu0 0.0
    %797 = vmatprep.subr.mxu0 0.0
    %798 = vmatpush1.msra.mxu0 0.0
    %799 = vmatprep.subr.mxu0 0.0
    %800 = vmatpush1.msra.mxu0 0.0
    %801 = vmatprep.subr.mxu0 0.0
    %802 = vmatpush1.msra.mxu0 0.0
    %803 = vmatprep.subr.mxu0 0.0
    %804 = vmatpush1.msra.mxu0 0.0
    %805 = vmatprep.subr.mxu0 0.0
    %806 = vmatpush1.msra.mxu0 0.0
    %807 = vmatprep.subr.mxu0 0.0
    %808 = vmatpush1.msra.mxu0 0.0
    %809 = vmatprep.subr.mxu0 0.0
    %810 = vmatpush1.msra.mxu0 0.0
    %811 = vmatprep.mubr.f32.mxu0 0.0
    %812 = vmatmul.mubr.f32.gmra.mrb[0].mxu0 %v674
    %v813 = vpop.f32.mrb[0].mxu0
    %v814 = vadd.f32 0.0, %v813
    %v815 = vpop.f32.mrb[0].mxu0
    %v816 = vadd.f32 0.0, %v815
    %817 = vdwg.mxu0
    %v822 = vrot.slane %v743, 6
    %v823 = vrot.slane %v745, 6
    %v824 = vrot.slane %v814, 6
    %v825 = vrot.slane %v816, 6
    %v830 = vadd.f32 %v243, %v822
    %v831 = vadd.f32 %v245, %v823
    %v832 = vadd.f32 %v314, %v824
    %v833 = vadd.f32 %v316, %v825
    %v834 = vxor.u32 %v830, 2147483648
    %v835 = vxor.u32 %v831, 2147483648
    %v836 = vmul.f32 %v834, 1.442695
    %v837 = vpow.pop %v836
    %v838 = vmul.f32 %v835, 1.442695
    %v839 = vpow.pop %v838
    %v840 = vadd.f32 %v837, 1.0
    %v841 = vadd.f32 %v839, 1.0
    %v842 = vrcp.pop %v840
    %v843 = vmul.f32 1.0, %v842
    %v844 = vrcp.pop %v841
    %v845 = vmul.f32 1.0, %v844
    %v846 = vtanh.pop %v832
    %v847 = vxor.u32 %v833, 2147483648
    %v848 = vmul.f32 %v847, 1.442695
    %v849 = vpow.pop %v848
    %v850 = vadd.f32 %v849, 1.0
    %v851 = vrcp.pop %v850
    %v852 = vmul.f32 1.0, %v851
    %v854 = vrot.slane %v670, 7
    %v856 = vmul.f32 %v845, %v854
    %v857 = vmul.f32 %v843, %v846
    %v858 = vadd.f32 %v856, %v857
    %v859 = vtanh.pop %v858
    %v860 = vmul.f32 %v852, %v859
    %v862 = vrot.slane %v860, 2
    %864 = vmatprep.subr.mxu0 %v87
    %865 = vmatpush1.msra.mxu0 %v86
    %866 = vmatprep.subr.mxu0 %v91
    %867 = vmatpush1.msra.mxu0 %v90
    %868 = vmatprep.subr.mxu0 %v95
    %869 = vmatpush1.msra.mxu0 %v94
    %870 = vmatprep.subr.mxu0 %v99
    %871 = vmatpush1.msra.mxu0 %v98
    %872 = vmatprep.subr.mxu0 %v103
    %873 = vmatpush1.msra.mxu0 %v102
    %874 = vmatprep.subr.mxu0 %v107
    %875 = vmatpush1.msra.mxu0 %v106
    %876 = vmatprep.subr.mxu0 %v111
    %877 = vmatpush1.msra.mxu0 %v110
    %878 = vmatprep.subr.mxu0 %v115
    %879 = vmatpush1.msra.mxu0 %v114
    %880 = vmatprep.subr.mxu0 %v119
    %881 = vmatpush1.msra.mxu0 %v118
    %882 = vmatprep.subr.mxu0 %v123
    %883 = vmatpush1.msra.mxu0 %v122
    %884 = vmatprep.subr.mxu0 %v127
    %885 = vmatpush1.msra.mxu0 %v126
    %886 = vmatprep.subr.mxu0 %v131
    %887 = vmatpush1.msra.mxu0 %v130
    %888 = vmatprep.subr.mxu0 %v135
    %889 = vmatpush1.msra.mxu0 %v134
    %890 = vmatprep.subr.mxu0 %v139
    %891 = vmatpush1.msra.mxu0 %v138
    %892 = vmatprep.subr.mxu0 %v143
    %893 = vmatpush1.msra.mxu0 %v142
    %894 = vmatprep.subr.mxu0 %v147
    %895 = vmatpush1.msra.mxu0 %v146
    %896 = vmatprep.subr.mxu0 0.0
    %897 = vmatpush1.msra.mxu0 0.0
    %898 = vmatprep.subr.mxu0 0.0
    %899 = vmatpush1.msra.mxu0 0.0
    %900 = vmatprep.subr.mxu0 0.0
    %901 = vmatpush1.msra.mxu0 0.0
    %902 = vmatprep.subr.mxu0 0.0
    %903 = vmatpush1.msra.mxu0 0.0
    %904 = vmatprep.subr.mxu0 0.0
    %905 = vmatpush1.msra.mxu0 0.0
    %906 = vmatprep.subr.mxu0 0.0
    %907 = vmatpush1.msra.mxu0 0.0
    %908 = vmatprep.subr.mxu0 0.0
    %909 = vmatpush1.msra.mxu0 0.0
    %910 = vmatprep.subr.mxu0 0.0
    %911 = vmatpush1.msra.mxu0 0.0
    %912 = vmatprep.subr.mxu0 0.0
    %913 = vmatpush1.msra.mxu0 0.0
    %914 = vmatprep.subr.mxu0 0.0
    %915 = vmatpush1.msra.mxu0 0.0
    %916 = vmatprep.subr.mxu0 0.0
    %917 = vmatpush1.msra.mxu0 0.0
    %918 = vmatprep.subr.mxu0 0.0
    %919 = vmatpush1.msra.mxu0 0.0
    %920 = vmatprep.subr.mxu0 0.0
    %921 = vmatpush1.msra.mxu0 0.0
    %922 = vmatprep.subr.mxu0 0.0
    %923 = vmatpush1.msra.mxu0 0.0
    %924 = vmatprep.subr.mxu0 0.0
    %925 = vmatpush1.msra.mxu0 0.0
    %926 = vmatprep.subr.mxu0 0.0
    %927 = vmatpush1.msra.mxu0 0.0
    %928 = vmatprep.mubr.f32.mxu0 0.0
    %929 = vmatmul.mubr.f32.gmra.mrb[0].mxu0 %v862
    %v930 = vpop.f32.mrb[0].mxu0
    %v931 = vadd.f32 0.0, %v930
    %v932 = vpop.f32.mrb[0].mxu0
    %v933 = vadd.f32 0.0, %v932
    %934 = vdwg.mxu0
    %935 = vmatprep.subr.mxu0 %v89
    %936 = vmatpush1.msra.mxu0 %v88
    %937 = vmatprep.subr.mxu0 %v93
    %938 = vmatpush1.msra.mxu0 %v92
    %939 = vmatprep.subr.mxu0 %v97
    %940 = vmatpush1.msra.mxu0 %v96
    %941 = vmatprep.subr.mxu0 %v101
    %942 = vmatpush1.msra.mxu0 %v100
    %943 = vmatprep.subr.mxu0 %v105
    %944 = vmatpush1.msra.mxu0 %v104
    %945 = vmatprep.subr.mxu0 %v109
    %946 = vmatpush1.msra.mxu0 %v108
    %947 = vmatprep.subr.mxu0 %v113
    %948 = vmatpush1.msra.mxu0 %v112
    %949 = vmatprep.subr.mxu0 %v117
    %950 = vmatpush1.msra.mxu0 %v116
    %951 = vmatprep.subr.mxu0 %v121
    %952 = vmatpush1.msra.mxu0 %v120
    %953 = vmatprep.subr.mxu0 %v125
    %954 = vmatpush1.msra.mxu0 %v124
    %955 = vmatprep.subr.mxu0 %v129
    %956 = vmatpush1.msra.mxu0 %v128
    %957 = vmatprep.subr.mxu0 %v133
    %958 = vmatpush1.msra.mxu0 %v132
    %959 = vmatprep.subr.mxu0 %v137
    %960 = vmatpush1.msra.mxu0 %v136
    %961 = vmatprep.subr.mxu0 %v141
    %962 = vmatpush1.msra.mxu0 %v140
    %963 = vmatprep.subr.mxu0 %v145
    %964 = vmatpush1.msra.mxu0 %v144
    %965 = vmatprep.subr.mxu0 %v149
    %966 = vmatpush1.msra.mxu0 %v148
    %967 = vmatprep.subr.mxu0 0.0
    %968 = vmatpush1.msra.mxu0 0.0
    %969 = vmatprep.subr.mxu0 0.0
    %970 = vmatpush1.msra.mxu0 0.0
    %971 = vmatprep.subr.mxu0 0.0
    %972 = vmatpush1.msra.mxu0 0.0
    %973 = vmatprep.subr.mxu0 0.0
    %974 = vmatpush1.msra.mxu0 0.0
    %975 = vmatprep.subr.mxu0 0.0
    %976 = vmatpush1.msra.mxu0 0.0
    %977 = vmatprep.subr.mxu0 0.0
    %978 = vmatpush1.msra.mxu0 0.0
    %979 = vmatprep.subr.mxu0 0.0
    %980 = vmatpush1.msra.mxu0 0.0
    %981 = vmatprep.subr.mxu0 0.0
    %982 = vmatpush1.msra.mxu0 0.0
    %983 = vmatprep.subr.mxu0 0.0
    %984 = vmatpush1.msra.mxu0 0.0
    %985 = vmatprep.subr.mxu0 0.0
    %986 = vmatpush1.msra.mxu0 0.0
    %987 = vmatprep.subr.mxu0 0.0
    %988 = vmatpush1.msra.mxu0 0.0
    %989 = vmatprep.subr.mxu0 0.0
    %990 = vmatpush1.msra.mxu0 0.0
    %991 = vmatprep.subr.mxu0 0.0
    %992 = vmatpush1.msra.mxu0 0.0
    %993 = vmatprep.subr.mxu0 0.0
    %994 = vmatpush1.msra.mxu0 0.0
    %995 = vmatprep.subr.mxu0 0.0
    %996 = vmatpush1.msra.mxu0 0.0
    %997 = vmatprep.subr.mxu0 0.0
    %998 = vmatpush1.msra.mxu0 0.0
    %999 = vmatprep.mubr.f32.mxu0 0.0
    %1000 = vmatmul.mubr.f32.gmra.mrb[0].mxu0 %v862
    %v1001 = vpop.f32.mrb[0].mxu0
    %v1002 = vadd.f32 0.0, %v1001
    %v1003 = vpop.f32.mrb[0].mxu0
    %v1004 = vadd.f32 0.0, %v1003
    %1005 = vdwg.mxu0
    %v1010 = vrot.slane %v931, 5
    %v1011 = vrot.slane %v933, 5
    %v1012 = vrot.slane %v1002, 5
    %v1013 = vrot.slane %v1004, 5
    %v1018 = vadd.f32 %v243, %v1010
    %v1019 = vadd.f32 %v245, %v1011
    %v1020 = vadd.f32 %v314, %v1012
    %v1021 = vadd.f32 %v316, %v1013
    %v1022 = vxor.u32 %v1018, 2147483648
    %v1023 = vxor.u32 %v1019, 2147483648
    %v1024 = vmul.f32 %v1022, 1.442695
    %v1025 = vpow.pop %v1024
    %v1026 = vmul.f32 %v1023, 1.442695
    %v1027 = vpow.pop %v1026
    %v1028 = vadd.f32 %v1025, 1.0
    %v1029 = vadd.f32 %v1027, 1.0
    %v1030 = vrcp.pop %v1028
    %v1031 = vmul.f32 1.0, %v1030
    %v1032 = vrcp.pop %v1029
    %v1033 = vmul.f32 1.0, %v1032
    %v1034 = vtanh.pop %v1020
    %v1035 = vxor.u32 %v1021, 2147483648
    %v1036 = vmul.f32 %v1035, 1.442695
    %v1037 = vpow.pop %v1036
    %v1038 = vadd.f32 %v1037, 1.0
    %v1039 = vrcp.pop %v1038
    %v1040 = vmul.f32 1.0, %v1039
    %v1042 = vrot.slane %v858, 7
    %v1044 = vmul.f32 %v1033, %v1042
    %v1045 = vmul.f32 %v1031, %v1034
    %v1046 = vadd.f32 %v1044, %v1045
    %v1047 = vtanh.pop %v1046
    %v1048 = vmul.f32 %v1040, %v1047
    %v1050 = vrot.slane %v1048, 3
    %1052 = vmatprep.subr.mxu0 %v87
    %1053 = vmatpush1.msra.mxu0 %v86
    %1054 = vmatprep.subr.mxu0 %v91
    %1055 = vmatpush1.msra.mxu0 %v90
    %1056 = vmatprep.subr.mxu0 %v95
    %1057 = vmatpush1.msra.mxu0 %v94
    %1058 = vmatprep.subr.mxu0 %v99
    %1059 = vmatpush1.msra.mxu0 %v98
    %1060 = vmatprep.subr.mxu0 %v103
    %1061 = vmatpush1.msra.mxu0 %v102
    %1062 = vmatprep.subr.mxu0 %v107
    %1063 = vmatpush1.msra.mxu0 %v106
    %1064 = vmatprep.subr.mxu0 %v111
    %1065 = vmatpush1.msra.mxu0 %v110
    %1066 = vmatprep.subr.mxu0 %v115
    %1067 = vmatpush1.msra.mxu0 %v114
    %1068 = vmatprep.subr.mxu0 %v119
    %1069 = vmatpush1.msra.mxu0 %v118
    %1070 = vmatprep.subr.mxu0 %v123
    %1071 = vmatpush1.msra.mxu0 %v122
    %1072 = vmatprep.subr.mxu0 %v127
    %1073 = vmatpush1.msra.mxu0 %v126
    %1074 = vmatprep.subr.mxu0 %v131
    %1075 = vmatpush1.msra.mxu0 %v130
    %1076 = vmatprep.subr.mxu0 %v135
    %1077 = vmatpush1.msra.mxu0 %v134
    %1078 = vmatprep.subr.mxu0 %v139
    %1079 = vmatpush1.msra.mxu0 %v138
    %1080 = vmatprep.subr.mxu0 %v143
    %1081 = vmatpush1.msra.mxu0 %v142
    %1082 = vmatprep.subr.mxu0 %v147
    %1083 = vmatpush1.msra.mxu0 %v146
    %1084 = vmatprep.subr.mxu0 0.0
    %1085 = vmatpush1.msra.mxu0 0.0
    %1086 = vmatprep.subr.mxu0 0.0
    %1087 = vmatpush1.msra.mxu0 0.0
    %1088 = vmatprep.subr.mxu0 0.0
    %1089 = vmatpush1.msra.mxu0 0.0
    %1090 = vmatprep.subr.mxu0 0.0
    %1091 = vmatpush1.msra.mxu0 0.0
    %1092 = vmatprep.subr.mxu0 0.0
    %1093 = vmatpush1.msra.mxu0 0.0
    %1094 = vmatprep.subr.mxu0 0.0
    %1095 = vmatpush1.msra.mxu0 0.0
    %1096 = vmatprep.subr.mxu0 0.0
    %1097 = vmatpush1.msra.mxu0 0.0
    %1098 = vmatprep.subr.mxu0 0.0
    %1099 = vmatpush1.msra.mxu0 0.0
    %1100 = vmatprep.subr.mxu0 0.0
    %1101 = vmatpush1.msra.mxu0 0.0
    %1102 = vmatprep.subr.mxu0 0.0
    %1103 = vmatpush1.msra.mxu0 0.0
    %1104 = vmatprep.subr.mxu0 0.0
    %1105 = vmatpush1.msra.mxu0 0.0
    %1106 = vmatprep.subr.mxu0 0.0
    %1107 = vmatpush1.msra.mxu0 0.0
    %1108 = vmatprep.subr.mxu0 0.0
    %1109 = vmatpush1.msra.mxu0 0.0
    %1110 = vmatprep.subr.mxu0 0.0
    %1111 = vmatpush1.msra.mxu0 0.0
    %1112 = vmatprep.subr.mxu0 0.0
    %1113 = vmatpush1.msra.mxu0 0.0
    %1114 = vmatprep.subr.mxu0 0.0
    %1115 = vmatpush1.msra.mxu0 0.0
    %1116 = vmatprep.mubr.f32.mxu0 0.0
    %1117 = vmatmul.mubr.f32.gmra.mrb[0].mxu0 %v1050
    %v1118 = vpop.f32.mrb[0].mxu0
    %v1119 = vadd.f32 0.0, %v1118
    %v1120 = vpop.f32.mrb[0].mxu0
    %v1121 = vadd.f32 0.0, %v1120
    %1122 = vdwg.mxu0
    %1123 = vmatprep.subr.mxu0 %v89
    %1124 = vmatpush1.msra.mxu0 %v88
    %1125 = vmatprep.subr.mxu0 %v93
    %1126 = vmatpush1.msra.mxu0 %v92
    %1127 = vmatprep.subr.mxu0 %v97
    %1128 = vmatpush1.msra.mxu0 %v96
    %1129 = vmatprep.subr.mxu0 %v101
    %1130 = vmatpush1.msra.mxu0 %v100
    %1131 = vmatprep.subr.mxu0 %v105
    %1132 = vmatpush1.msra.mxu0 %v104
    %1133 = vmatprep.subr.mxu0 %v109
    %1134 = vmatpush1.msra.mxu0 %v108
    %1135 = vmatprep.subr.mxu0 %v113
    %1136 = vmatpush1.msra.mxu0 %v112
    %1137 = vmatprep.subr.mxu0 %v117
    %1138 = vmatpush1.msra.mxu0 %v116
    %1139 = vmatprep.subr.mxu0 %v121
    %1140 = vmatpush1.msra.mxu0 %v120
    %1141 = vmatprep.subr.mxu0 %v125
    %1142 = vmatpush1.msra.mxu0 %v124
    %1143 = vmatprep.subr.mxu0 %v129
    %1144 = vmatpush1.msra.mxu0 %v128
    %1145 = vmatprep.subr.mxu0 %v133
    %1146 = vmatpush1.msra.mxu0 %v132
    %1147 = vmatprep.subr.mxu0 %v137
    %1148 = vmatpush1.msra.mxu0 %v136
    %1149 = vmatprep.subr.mxu0 %v141
    %1150 = vmatpush1.msra.mxu0 %v140
    %1151 = vmatprep.subr.mxu0 %v145
    %1152 = vmatpush1.msra.mxu0 %v144
    %1153 = vmatprep.subr.mxu0 %v149
    %1154 = vmatpush1.msra.mxu0 %v148
    %1155 = vmatprep.subr.mxu0 0.0
    %1156 = vmatpush1.msra.mxu0 0.0
    %1157 = vmatprep.subr.mxu0 0.0
    %1158 = vmatpush1.msra.mxu0 0.0
    %1159 = vmatprep.subr.mxu0 0.0
    %1160 = vmatpush1.msra.mxu0 0.0
    %1161 = vmatprep.subr.mxu0 0.0
    %1162 = vmatpush1.msra.mxu0 0.0
    %1163 = vmatprep.subr.mxu0 0.0
    %1164 = vmatpush1.msra.mxu0 0.0
    %1165 = vmatprep.subr.mxu0 0.0
    %1166 = vmatpush1.msra.mxu0 0.0
    %1167 = vmatprep.subr.mxu0 0.0
    %1168 = vmatpush1.msra.mxu0 0.0
    %1169 = vmatprep.subr.mxu0 0.0
    %1170 = vmatpush1.msra.mxu0 0.0
    %1171 = vmatprep.subr.mxu0 0.0
    %1172 = vmatpush1.msra.mxu0 0.0
    %1173 = vmatprep.subr.mxu0 0.0
    %1174 = vmatpush1.msra.mxu0 0.0
    %1175 = vmatprep.subr.mxu0 0.0
    %1176 = vmatpush1.msra.mxu0 0.0
    %1177 = vmatprep.subr.mxu0 0.0
    %1178 = vmatpush1.msra.mxu0 0.0
    %1179 = vmatprep.subr.mxu0 0.0
    %1180 = vmatpush1.msra.mxu0 0.0
    %1181 = vmatprep.subr.mxu0 0.0
    %1182 = vmatpush1.msra.mxu0 0.0
    %1183 = vmatprep.subr.mxu0 0.0
    %1184 = vmatpush1.msra.mxu0 0.0
    %1185 = vmatprep.subr.mxu0 0.0
    %1186 = vmatpush1.msra.mxu0 0.0
    %1187 = vmatprep.mubr.f32.mxu0 0.0
    %1188 = vmatmul.mubr.f32.gmra.mrb[0].mxu0 %v1050
    %v1189 = vpop.f32.mrb[0].mxu0
    %v1190 = vadd.f32 0.0, %v1189
    %v1191 = vpop.f32.mrb[0].mxu0
    %v1192 = vadd.f32 0.0, %v1191
    %1193 = vdwg.mxu0
    %v1198 = vrot.slane %v1119, 4
    %v1199 = vrot.slane %v1121, 4
    %v1200 = vrot.slane %v1190, 4
    %v1201 = vrot.slane %v1192, 4
    %v1206 = vadd.f32 %v243, %v1198
    %v1207 = vadd.f32 %v245, %v1199
    %v1208 = vadd.f32 %v314, %v1200
    %v1209 = vadd.f32 %v316, %v1201
    %v1210 = vxor.u32 %v1206, 2147483648
    %v1211 = vxor.u32 %v1207, 2147483648
    %v1212 = vmul.f32 %v1210, 1.442695
    %v1213 = vpow.pop %v1212
    %v1214 = vmul.f32 %v1211, 1.442695
    %v1215 = vpow.pop %v1214
    %v1216 = vadd.f32 %v1213, 1.0
    %v1217 = vadd.f32 %v1215, 1.0
    %v1218 = vrcp.pop %v1216
    %v1219 = vmul.f32 1.0, %v1218
    %v1220 = vrcp.pop %v1217
    %v1221 = vmul.f32 1.0, %v1220
    %v1222 = vtanh.pop %v1208
    %v1223 = vxor.u32 %v1209, 2147483648
    %v1224 = vmul.f32 %v1223, 1.442695
    %v1225 = vpow.pop %v1224
    %v1226 = vadd.f32 %v1225, 1.0
    %v1227 = vrcp.pop %v1226
    %v1228 = vmul.f32 1.0, %v1227
    %v1230 = vrot.slane %v1046, 7
    %v1232 = vmul.f32 %v1221, %v1230
    %v1233 = vmul.f32 %v1219, %v1222
    %v1234 = vadd.f32 %v1232, %v1233
    %v1235 = vtanh.pop %v1234
    %v1236 = vmul.f32 %v1228, %v1235
    %v1238 = vrot.slane %v1236, 4
    %1240 = vmatprep.subr.mxu0 %v87
    %1241 = vmatpush1.msra.mxu0 %v86
    %1242 = vmatprep.subr.mxu0 %v91
    %1243 = vmatpush1.msra.mxu0 %v90
    %1244 = vmatprep.subr.mxu0 %v95
    %1245 = vmatpush1.msra.mxu0 %v94
    %1246 = vmatprep.subr.mxu0 %v99
    %1247 = vmatpush1.msra.mxu0 %v98
    %1248 = vmatprep.subr.mxu0 %v103
    %1249 = vmatpush1.msra.mxu0 %v102
    %1250 = vmatprep.subr.mxu0 %v107
    %1251 = vmatpush1.msra.mxu0 %v106
    %1252 = vmatprep.subr.mxu0 %v111
    %1253 = vmatpush1.msra.mxu0 %v110
    %1254 = vmatprep.subr.mxu0 %v115
    %1255 = vmatpush1.msra.mxu0 %v114
    %1256 = vmatprep.subr.mxu0 %v119
    %1257 = vmatpush1.msra.mxu0 %v118
    %1258 = vmatprep.subr.mxu0 %v123
    %1259 = vmatpush1.msra.mxu0 %v122
    %1260 = vmatprep.subr.mxu0 %v127
    %1261 = vmatpush1.msra.mxu0 %v126
    %1262 = vmatprep.subr.mxu0 %v131
    %1263 = vmatpush1.msra.mxu0 %v130
    %1264 = vmatprep.subr.mxu0 %v135
    %1265 = vmatpush1.msra.mxu0 %v134
    %1266 = vmatprep.subr.mxu0 %v139
    %1267 = vmatpush1.msra.mxu0 %v138
    %1268 = vmatprep.subr.mxu0 %v143
    %1269 = vmatpush1.msra.mxu0 %v142
    %1270 = vmatprep.subr.mxu0 %v147
    %1271 = vmatpush1.msra.mxu0 %v146
    %1272 = vmatprep.subr.mxu0 0.0
    %1273 = vmatpush1.msra.mxu0 0.0
    %1274 = vmatprep.subr.mxu0 0.0
    %1275 = vmatpush1.msra.mxu0 0.0
    %1276 = vmatprep.subr.mxu0 0.0
    %1277 = vmatpush1.msra.mxu0 0.0
    %1278 = vmatprep.subr.mxu0 0.0
    %1279 = vmatpush1.msra.mxu0 0.0
    %1280 = vmatprep.subr.mxu0 0.0
    %1281 = vmatpush1.msra.mxu0 0.0
    %1282 = vmatprep.subr.mxu0 0.0
    %1283 = vmatpush1.msra.mxu0 0.0
    %1284 = vmatprep.subr.mxu0 0.0
    %1285 = vmatpush1.msra.mxu0 0.0
    %1286 = vmatprep.subr.mxu0 0.0
    %1287 = vmatpush1.msra.mxu0 0.0
    %1288 = vmatprep.subr.mxu0 0.0
    %1289 = vmatpush1.msra.mxu0 0.0
    %1290 = vmatprep.subr.mxu0 0.0
    %1291 = vmatpush1.msra.mxu0 0.0
    %1292 = vmatprep.subr.mxu0 0.0
    %1293 = vmatpush1.msra.mxu0 0.0
    %1294 = vmatprep.subr.mxu0 0.0
    %1295 = vmatpush1.msra.mxu0 0.0
    %1296 = vmatprep.subr.mxu0 0.0
    %1297 = vmatpush1.msra.mxu0 0.0
    %1298 = vmatprep.subr.mxu0 0.0
    %1299 = vmatpush1.msra.mxu0 0.0
    %1300 = vmatprep.subr.mxu0 0.0
    %1301 = vmatpush1.msra.mxu0 0.0
    %1302 = vmatprep.subr.mxu0 0.0
    %1303 = vmatpush1.msra.mxu0 0.0
    %1304 = vmatprep.mubr.f32.mxu0 0.0
    %1305 = vmatmul.mubr.f32.gmra.mrb[0].mxu0 %v1238
    %v1306 = vpop.f32.mrb[0].mxu0
    %v1307 = vadd.f32 0.0, %v1306
    %v1308 = vpop.f32.mrb[0].mxu0
    %v1309 = vadd.f32 0.0, %v1308
    %1310 = vdwg.mxu0
    %1311 = vmatprep.subr.mxu0 %v89
    %1312 = vmatpush1.msra.mxu0 %v88
    %1313 = vmatprep.subr.mxu0 %v93
    %1314 = vmatpush1.msra.mxu0 %v92
    %1315 = vmatprep.subr.mxu0 %v97
    %1316 = vmatpush1.msra.mxu0 %v96
    %1317 = vmatprep.subr.mxu0 %v101
    %1318 = vmatpush1.msra.mxu0 %v100
    %1319 = vmatprep.subr.mxu0 %v105
    %1320 = vmatpush1.msra.mxu0 %v104
    %1321 = vmatprep.subr.mxu0 %v109
    %1322 = vmatpush1.msra.mxu0 %v108
    %1323 = vmatprep.subr.mxu0 %v113
    %1324 = vmatpush1.msra.mxu0 %v112
    %1325 = vmatprep.subr.mxu0 %v117
    %1326 = vmatpush1.msra.mxu0 %v116
    %1327 = vmatprep.subr.mxu0 %v121
    %1328 = vmatpush1.msra.mxu0 %v120
    %1329 = vmatprep.subr.mxu0 %v125
    %1330 = vmatpush1.msra.mxu0 %v124
    %1331 = vmatprep.subr.mxu0 %v129
    %1332 = vmatpush1.msra.mxu0 %v128
    %1333 = vmatprep.subr.mxu0 %v133
    %1334 = vmatpush1.msra.mxu0 %v132
    %1335 = vmatprep.subr.mxu0 %v137
    %1336 = vmatpush1.msra.mxu0 %v136
    %1337 = vmatprep.subr.mxu0 %v141
    %1338 = vmatpush1.msra.mxu0 %v140
    %1339 = vmatprep.subr.mxu0 %v145
    %1340 = vmatpush1.msra.mxu0 %v144
    %1341 = vmatprep.subr.mxu0 %v149
    %1342 = vmatpush1.msra.mxu0 %v148
    %1343 = vmatprep.subr.mxu0 0.0
    %1344 = vmatpush1.msra.mxu0 0.0
    %1345 = vmatprep.subr.mxu0 0.0
    %1346 = vmatpush1.msra.mxu0 0.0
    %1347 = vmatprep.subr.mxu0 0.0
    %1348 = vmatpush1.msra.mxu0 0.0
    %1349 = vmatprep.subr.mxu0 0.0
    %1350 = vmatpush1.msra.mxu0 0.0
    %1351 = vmatprep.subr.mxu0 0.0
    %1352 = vmatpush1.msra.mxu0 0.0
    %1353 = vmatprep.subr.mxu0 0.0
    %1354 = vmatpush1.msra.mxu0 0.0
    %1355 = vmatprep.subr.mxu0 0.0
    %1356 = vmatpush1.msra.mxu0 0.0
    %1357 = vmatprep.subr.mxu0 0.0
    %1358 = vmatpush1.msra.mxu0 0.0
    %1359 = vmatprep.subr.mxu0 0.0
    %1360 = vmatpush1.msra.mxu0 0.0
    %1361 = vmatprep.subr.mxu0 0.0
    %1362 = vmatpush1.msra.mxu0 0.0
    %1363 = vmatprep.subr.mxu0 0.0
    %1364 = vmatpush1.msra.mxu0 0.0
    %1365 = vmatprep.subr.mxu0 0.0
    %1366 = vmatpush1.msra.mxu0 0.0
    %1367 = vmatprep.subr.mxu0 0.0
    %1368 = vmatpush1.msra.mxu0 0.0
    %1369 = vmatprep.subr.mxu0 0.0
    %1370 = vmatpush1.msra.mxu0 0.0
    %1371 = vmatprep.subr.mxu0 0.0
    %1372 = vmatpush1.msra.mxu0 0.0
    %1373 = vmatprep.subr.mxu0 0.0
    %1374 = vmatpush1.msra.mxu0 0.0
    %1375 = vmatprep.mubr.f32.mxu0 0.0
    %1376 = vmatmul.mubr.f32.gmra.mrb[0].mxu0 %v1238
    %v1377 = vpop.f32.mrb[0].mxu0
    %v1378 = vadd.f32 0.0, %v1377
    %v1379 = vpop.f32.mrb[0].mxu0
    %v1380 = vadd.f32 0.0, %v1379
    %1381 = vdwg.mxu0
    %v1386 = vrot.slane %v1307, 3
    %v1387 = vrot.slane %v1309, 3
    %v1388 = vrot.slane %v1378, 3
    %v1389 = vrot.slane %v1380, 3
    %v1394 = vadd.f32 %v243, %v1386
    %v1395 = vadd.f32 %v245, %v1387
    %v1396 = vadd.f32 %v314, %v1388
    %v1397 = vadd.f32 %v316, %v1389
    %v1398 = vxor.u32 %v1394, 2147483648
    %v1399 = vxor.u32 %v1395, 2147483648
    %v1400 = vmul.f32 %v1398, 1.442695
    %v1401 = vpow.pop %v1400
    %v1402 = vmul.f32 %v1399, 1.442695
    %v1403 = vpow.pop %v1402
    %v1404 = vadd.f32 %v1401, 1.0
    %v1405 = vadd.f32 %v1403, 1.0
    %v1406 = vrcp.pop %v1404
    %v1407 = vmul.f32 1.0, %v1406
    %v1408 = vrcp.pop %v1405
    %v1409 = vmul.f32 1.0, %v1408
    %v1410 = vtanh.pop %v1396
    %v1411 = vxor.u32 %v1397, 2147483648
    %v1412 = vmul.f32 %v1411, 1.442695
    %v1413 = vpow.pop %v1412
    %v1414 = vadd.f32 %v1413, 1.0
    %v1415 = vrcp.pop %v1414
    %v1416 = vmul.f32 1.0, %v1415
    %v1418 = vrot.slane %v1234, 7
    %v1420 = vmul.f32 %v1409, %v1418
    %v1421 = vmul.f32 %v1407, %v1410
    %v1422 = vadd.f32 %v1420, %v1421
    %v1423 = vtanh.pop %v1422
    %v1424 = vmul.f32 %v1416, %v1423
    %v1426 = vrot.slane %v1424, 5
    %1428 = vmatprep.subr.mxu0 %v87
    %1429 = vmatpush1.msra.mxu0 %v86
    %1430 = vmatprep.subr.mxu0 %v91
    %1431 = vmatpush1.msra.mxu0 %v90
    %1432 = vmatprep.subr.mxu0 %v95
    %1433 = vmatpush1.msra.mxu0 %v94
    %1434 = vmatprep.subr.mxu0 %v99
    %1435 = vmatpush1.msra.mxu0 %v98
    %1436 = vmatprep.subr.mxu0 %v103
    %1437 = vmatpush1.msra.mxu0 %v102
    %1438 = vmatprep.subr.mxu0 %v107
    %1439 = vmatpush1.msra.mxu0 %v106
    %1440 = vmatprep.subr.mxu0 %v111
    %1441 = vmatpush1.msra.mxu0 %v110
    %1442 = vmatprep.subr.mxu0 %v115
    %1443 = vmatpush1.msra.mxu0 %v114
    %1444 = vmatprep.subr.mxu0 %v119
    %1445 = vmatpush1.msra.mxu0 %v118
    %1446 = vmatprep.subr.mxu0 %v123
    %1447 = vmatpush1.msra.mxu0 %v122
    %1448 = vmatprep.subr.mxu0 %v127
    %1449 = vmatpush1.msra.mxu0 %v126
    %1450 = vmatprep.subr.mxu0 %v131
    %1451 = vmatpush1.msra.mxu0 %v130
    %1452 = vmatprep.subr.mxu0 %v135
    %1453 = vmatpush1.msra.mxu0 %v134
    %1454 = vmatprep.subr.mxu0 %v139
    %1455 = vmatpush1.msra.mxu0 %v138
    %1456 = vmatprep.subr.mxu0 %v143
    %1457 = vmatpush1.msra.mxu0 %v142
    %1458 = vmatprep.subr.mxu0 %v147
    %1459 = vmatpush1.msra.mxu0 %v146
    %1460 = vmatprep.subr.mxu0 0.0
    %1461 = vmatpush1.msra.mxu0 0.0
    %1462 = vmatprep.subr.mxu0 0.0
    %1463 = vmatpush1.msra.mxu0 0.0
    %1464 = vmatprep.subr.mxu0 0.0
    %1465 = vmatpush1.msra.mxu0 0.0
    %1466 = vmatprep.subr.mxu0 0.0
    %1467 = vmatpush1.msra.mxu0 0.0
    %1468 = vmatprep.subr.mxu0 0.0
    %1469 = vmatpush1.msra.mxu0 0.0
    %1470 = vmatprep.subr.mxu0 0.0
    %1471 = vmatpush1.msra.mxu0 0.0
    %1472 = vmatprep.subr.mxu0 0.0
    %1473 = vmatpush1.msra.mxu0 0.0
    %1474 = vmatprep.subr.mxu0 0.0
    %1475 = vmatpush1.msra.mxu0 0.0
    %1476 = vmatprep.subr.mxu0 0.0
    %1477 = vmatpush1.msra.mxu0 0.0
    %1478 = vmatprep.subr.mxu0 0.0
    %1479 = vmatpush1.msra.mxu0 0.0
    %1480 = vmatprep.subr.mxu0 0.0
    %1481 = vmatpush1.msra.mxu0 0.0
    %1482 = vmatprep.subr.mxu0 0.0
    %1483 = vmatpush1.msra.mxu0 0.0
    %1484 = vmatprep.subr.mxu0 0.0
    %1485 = vmatpush1.msra.mxu0 0.0
    %1486 = vmatprep.subr.mxu0 0.0
    %1487 = vmatpush1.msra.mxu0 0.0
    %1488 = vmatprep.subr.mxu0 0.0
    %1489 = vmatpush1.msra.mxu0 0.0
    %1490 = vmatprep.subr.mxu0 0.0
    %1491 = vmatpush1.msra.mxu0 0.0
    %1492 = vmatprep.mubr.f32.mxu0 0.0
    %1493 = vmatmul.mubr.f32.gmra.mrb[0].mxu0 %v1426
    %v1494 = vpop.f32.mrb[0].mxu0
    %v1495 = vadd.f32 0.0, %v1494
    %v1496 = vpop.f32.mrb[0].mxu0
    %v1497 = vadd.f32 0.0, %v1496
    %1498 = vdwg.mxu0
    %1499 = vmatprep.subr.mxu0 %v89
    %1500 = vmatpush1.msra.mxu0 %v88
    %1501 = vmatprep.subr.mxu0 %v93
    %1502 = vmatpush1.msra.mxu0 %v92
    %1503 = vmatprep.subr.mxu0 %v97
    %1504 = vmatpush1.msra.mxu0 %v96
    %1505 = vmatprep.subr.mxu0 %v101
    %1506 = vmatpush1.msra.mxu0 %v100
    %1507 = vmatprep.subr.mxu0 %v105
    %1508 = vmatpush1.msra.mxu0 %v104
    %1509 = vmatprep.subr.mxu0 %v109
    %1510 = vmatpush1.msra.mxu0 %v108
    %1511 = vmatprep.subr.mxu0 %v113
    %1512 = vmatpush1.msra.mxu0 %v112
    %1513 = vmatprep.subr.mxu0 %v117
    %1514 = vmatpush1.msra.mxu0 %v116
    %1515 = vmatprep.subr.mxu0 %v121
    %1516 = vmatpush1.msra.mxu0 %v120
    %1517 = vmatprep.subr.mxu0 %v125
    %1518 = vmatpush1.msra.mxu0 %v124
    %1519 = vmatprep.subr.mxu0 %v129
    %1520 = vmatpush1.msra.mxu0 %v128
    %1521 = vmatprep.subr.mxu0 %v133
    %1522 = vmatpush1.msra.mxu0 %v132
    %1523 = vmatprep.subr.mxu0 %v137
    %1524 = vmatpush1.msra.mxu0 %v136
    %1525 = vmatprep.subr.mxu0 %v141
    %1526 = vmatpush1.msra.mxu0 %v140
    %1527 = vmatprep.subr.mxu0 %v145
    %1528 = vmatpush1.msra.mxu0 %v144
    %1529 = vmatprep.subr.mxu0 %v149
    %1530 = vmatpush1.msra.mxu0 %v148
    %1531 = vmatprep.subr.mxu0 0.0
    %1532 = vmatpush1.msra.mxu0 0.0
    %1533 = vmatprep.subr.mxu0 0.0
    %1534 = vmatpush1.msra.mxu0 0.0
    %1535 = vmatprep.subr.mxu0 0.0
    %1536 = vmatpush1.msra.mxu0 0.0
    %1537 = vmatprep.subr.mxu0 0.0
    %1538 = vmatpush1.msra.mxu0 0.0
    %1539 = vmatprep.subr.mxu0 0.0
    %1540 = vmatpush1.msra.mxu0 0.0
    %1541 = vmatprep.subr.mxu0 0.0
    %1542 = vmatpush1.msra.mxu0 0.0
    %1543 = vmatprep.subr.mxu0 0.0
    %1544 = vmatpush1.msra.mxu0 0.0
    %1545 = vmatprep.subr.mxu0 0.0
    %1546 = vmatpush1.msra.mxu0 0.0
    %1547 = vmatprep.subr.mxu0 0.0
    %1548 = vmatpush1.msra.mxu0 0.0
    %1549 = vmatprep.subr.mxu0 0.0
    %1550 = vmatpush1.msra.mxu0 0.0
    %1551 = vmatprep.subr.mxu0 0.0
    %1552 = vmatpush1.msra.mxu0 0.0
    %1553 = vmatprep.subr.mxu0 0.0
    %1554 = vmatpush1.msra.mxu0 0.0
    %1555 = vmatprep.subr.mxu0 0.0
    %1556 = vmatpush1.msra.mxu0 0.0
    %1557 = vmatprep.subr.mxu0 0.0
    %1558 = vmatpush1.msra.mxu0 0.0
    %1559 = vmatprep.subr.mxu0 0.0
    %1560 = vmatpush1.msra.mxu0 0.0
    %1561 = vmatprep.subr.mxu0 0.0
    %1562 = vmatpush1.msra.mxu0 0.0
    %1563 = vmatprep.mubr.f32.mxu0 0.0
    %1564 = vmatmul.mubr.f32.gmra.mrb[0].mxu0 %v1426
    %v1565 = vpop.f32.mrb[0].mxu0
    %v1566 = vadd.f32 0.0, %v1565
    %v1567 = vpop.f32.mrb[0].mxu0
    %v1568 = vadd.f32 0.0, %v1567
    %1569 = vdwg.mxu0
    %v1574 = vrot.slane %v1495, 2
    %v1575 = vrot.slane %v1497, 2
    %v1576 = vrot.slane %v1566, 2
    %v1577 = vrot.slane %v1568, 2
    %v1582 = vadd.f32 %v243, %v1574
    %v1583 = vadd.f32 %v245, %v1575
    %v1584 = vadd.f32 %v314, %v1576
    %v1585 = vadd.f32 %v316, %v1577
    %v1586 = vxor.u32 %v1582, 2147483648
    %v1587 = vxor.u32 %v1583, 2147483648
    %v1588 = vmul.f32 %v1586, 1.442695
    %v1589 = vpow.pop %v1588
    %v1590 = vmul.f32 %v1587, 1.442695
    %v1591 = vpow.pop %v1590
    %v1592 = vadd.f32 %v1589, 1.0
    %v1593 = vadd.f32 %v1591, 1.0
    %v1594 = vrcp.pop %v1592
    %v1595 = vmul.f32 1.0, %v1594
    %v1596 = vrcp.pop %v1593
    %v1597 = vmul.f32 1.0, %v1596
    %v1598 = vtanh.pop %v1584
    %v1599 = vxor.u32 %v1585, 2147483648
    %v1600 = vmul.f32 %v1599, 1.442695
    %v1601 = vpow.pop %v1600
    %v1602 = vadd.f32 %v1601, 1.0
    %v1603 = vrcp.pop %v1602
    %v1604 = vmul.f32 1.0, %v1603
    %v1606 = vrot.slane %v1422, 7
    %v1608 = vmul.f32 %v1597, %v1606
    %v1609 = vmul.f32 %v1595, %v1598
    %v1610 = vadd.f32 %v1608, %v1609
    %v1611 = vtanh.pop %v1610
    %v1612 = vmul.f32 %v1604, %v1611
    %v1614 = vrot.slane %v1612, 6
    %1616 = vmatprep.subr.mxu0 %v87
    %1617 = vmatpush1.msra.mxu0 %v86
    %1618 = vmatprep.subr.mxu0 %v91
    %1619 = vmatpush1.msra.mxu0 %v90
    %1620 = vmatprep.subr.mxu0 %v95
    %1621 = vmatpush1.msra.mxu0 %v94
    %1622 = vmatprep.subr.mxu0 %v99
    %1623 = vmatpush1.msra.mxu0 %v98
    %1624 = vmatprep.subr.mxu0 %v103
    %1625 = vmatpush1.msra.mxu0 %v102
    %1626 = vmatprep.subr.mxu0 %v107
    %1627 = vmatpush1.msra.mxu0 %v106
    %1628 = vmatprep.subr.mxu0 %v111
    %1629 = vmatpush1.msra.mxu0 %v110
    %1630 = vmatprep.subr.mxu0 %v115
    %1631 = vmatpush1.msra.mxu0 %v114
    %1632 = vmatprep.subr.mxu0 %v119
    %1633 = vmatpush1.msra.mxu0 %v118
    %1634 = vmatprep.subr.mxu0 %v123
    %1635 = vmatpush1.msra.mxu0 %v122
    %1636 = vmatprep.subr.mxu0 %v127
    %1637 = vmatpush1.msra.mxu0 %v126
    %1638 = vmatprep.subr.mxu0 %v131
    %1639 = vmatpush1.msra.mxu0 %v130
    %1640 = vmatprep.subr.mxu0 %v135
    %1641 = vmatpush1.msra.mxu0 %v134
    %1642 = vmatprep.subr.mxu0 %v139
    %1643 = vmatpush1.msra.mxu0 %v138
    %1644 = vmatprep.subr.mxu0 %v143
    %1645 = vmatpush1.msra.mxu0 %v142
    %1646 = vmatprep.subr.mxu0 %v147
    %1647 = vmatpush1.msra.mxu0 %v146
    %1648 = vmatprep.subr.mxu0 0.0
    %1649 = vmatpush1.msra.mxu0 0.0
    %1650 = vmatprep.subr.mxu0 0.0
    %1651 = vmatpush1.msra.mxu0 0.0
    %1652 = vmatprep.subr.mxu0 0.0
    %1653 = vmatpush1.msra.mxu0 0.0
    %1654 = vmatprep.subr.mxu0 0.0
    %1655 = vmatpush1.msra.mxu0 0.0
    %1656 = vmatprep.subr.mxu0 0.0
    %1657 = vmatpush1.msra.mxu0 0.0
    %1658 = vmatprep.subr.mxu0 0.0
    %1659 = vmatpush1.msra.mxu0 0.0
    %1660 = vmatprep.subr.mxu0 0.0
    %1661 = vmatpush1.msra.mxu0 0.0
    %1662 = vmatprep.subr.mxu0 0.0
    %1663 = vmatpush1.msra.mxu0 0.0
    %1664 = vmatprep.subr.mxu0 0.0
    %1665 = vmatpush1.msra.mxu0 0.0
    %1666 = vmatprep.subr.mxu0 0.0
    %1667 = vmatpush1.msra.mxu0 0.0
    %1668 = vmatprep.subr.mxu0 0.0
    %1669 = vmatpush1.msra.mxu0 0.0
    %1670 = vmatprep.subr.mxu0 0.0
    %1671 = vmatpush1.msra.mxu0 0.0
    %1672 = vmatprep.subr.mxu0 0.0
    %1673 = vmatpush1.msra.mxu0 0.0
    %1674 = vmatprep.subr.mxu0 0.0
    %1675 = vmatpush1.msra.mxu0 0.0
    %1676 = vmatprep.subr.mxu0 0.0
    %1677 = vmatpush1.msra.mxu0 0.0
    %1678 = vmatprep.subr.mxu0 0.0
    %1679 = vmatpush1.msra.mxu0 0.0
    %1680 = vmatprep.mubr.f32.mxu0 0.0
    %1681 = vmatmul.mubr.f32.gmra.mrb[0].mxu0 %v1614
    %v1682 = vpop.f32.mrb[0].mxu0
    %v1683 = vadd.f32 0.0, %v1682
    %v1684 = vpop.f32.mrb[0].mxu0
    %v1685 = vadd.f32 0.0, %v1684
    %1686 = vdwg.mxu0
    %1687 = vmatprep.subr.mxu0 %v89
    %1688 = vmatpush1.msra.mxu0 %v88
    %1689 = vmatprep.subr.mxu0 %v93
    %1690 = vmatpush1.msra.mxu0 %v92
    %1691 = vmatprep.subr.mxu0 %v97
    %1692 = vmatpush1.msra.mxu0 %v96
    %1693 = vmatprep.subr.mxu0 %v101
    %1694 = vmatpush1.msra.mxu0 %v100
    %1695 = vmatprep.subr.mxu0 %v105
    %1696 = vmatpush1.msra.mxu0 %v104
    %1697 = vmatprep.subr.mxu0 %v109
    %1698 = vmatpush1.msra.mxu0 %v108
    %1699 = vmatprep.subr.mxu0 %v113
    %1700 = vmatpush1.msra.mxu0 %v112
    %1701 = vmatprep.subr.mxu0 %v117
    %1702 = vmatpush1.msra.mxu0 %v116
    %1703 = vmatprep.subr.mxu0 %v121
    %1704 = vmatpush1.msra.mxu0 %v120
    %1705 = vmatprep.subr.mxu0 %v125
    %1706 = vmatpush1.msra.mxu0 %v124
    %1707 = vmatprep.subr.mxu0 %v129
    %1708 = vmatpush1.msra.mxu0 %v128
    %1709 = vmatprep.subr.mxu0 %v133
    %1710 = vmatpush1.msra.mxu0 %v132
    %1711 = vmatprep.subr.mxu0 %v137
    %1712 = vmatpush1.msra.mxu0 %v136
    %1713 = vmatprep.subr.mxu0 %v141
    %1714 = vmatpush1.msra.mxu0 %v140
    %1715 = vmatprep.subr.mxu0 %v145
    %1716 = vmatpush1.msra.mxu0 %v144
    %1717 = vmatprep.subr.mxu0 %v149
    %1718 = vmatpush1.msra.mxu0 %v148
    %1719 = vmatprep.subr.mxu0 0.0
    %1720 = vmatpush1.msra.mxu0 0.0
    %1721 = vmatprep.subr.mxu0 0.0
    %1722 = vmatpush1.msra.mxu0 0.0
    %1723 = vmatprep.subr.mxu0 0.0
    %1724 = vmatpush1.msra.mxu0 0.0
    %1725 = vmatprep.subr.mxu0 0.0
    %1726 = vmatpush1.msra.mxu0 0.0
    %1727 = vmatprep.subr.mxu0 0.0
    %1728 = vmatpush1.msra.mxu0 0.0
    %1729 = vmatprep.subr.mxu0 0.0
    %1730 = vmatpush1.msra.mxu0 0.0
    %1731 = vmatprep.subr.mxu0 0.0
    %1732 = vmatpush1.msra.mxu0 0.0
    %1733 = vmatprep.subr.mxu0 0.0
    %1734 = vmatpush1.msra.mxu0 0.0
    %1735 = vmatprep.subr.mxu0 0.0
    %1736 = vmatpush1.msra.mxu0 0.0
    %1737 = vmatprep.subr.mxu0 0.0
    %1738 = vmatpush1.msra.mxu0 0.0
    %1739 = vmatprep.subr.mxu0 0.0
    %1740 = vmatpush1.msra.mxu0 0.0
    %1741 = vmatprep.subr.mxu0 0.0
    %1742 = vmatpush1.msra.mxu0 0.0
    %1743 = vmatprep.subr.mxu0 0.0
    %1744 = vmatpush1.msra.mxu0 0.0
    %1745 = vmatprep.subr.mxu0 0.0
    %1746 = vmatpush1.msra.mxu0 0.0
    %1747 = vmatprep.subr.mxu0 0.0
    %1748 = vmatpush1.msra.mxu0 0.0
    %1749 = vmatprep.subr.mxu0 0.0
    %1750 = vmatpush1.msra.mxu0 0.0
    %1751 = vmatprep.mubr.f32.mxu0 0.0
    %1752 = vmatmul.mubr.f32.gmra.mrb[0].mxu0 %v1614
    %v1753 = vpop.f32.mrb[0].mxu0
    %v1754 = vadd.f32 0.0, %v1753
    %v1755 = vpop.f32.mrb[0].mxu0
    %v1756 = vadd.f32 0.0, %v1755
    %1757 = vdwg.mxu0
    %v1762 = vrot.slane %v1683, 1
    %v1763 = vrot.slane %v1685, 1
    %v1764 = vrot.slane %v1754, 1
    %v1765 = vrot.slane %v1756, 1
    %v1770 = vadd.f32 %v243, %v1762
    %v1771 = vadd.f32 %v245, %v1763
    %v1772 = vadd.f32 %v314, %v1764
    %v1773 = vadd.f32 %v316, %v1765
    %v1774 = vxor.u32 %v1770, 2147483648
    %v1775 = vxor.u32 %v1771, 2147483648
    %v1776 = vmul.f32 %v1774, 1.442695
    %v1777 = vpow.pop %v1776
    %v1778 = vmul.f32 %v1775, 1.442695
    %v1779 = vpow.pop %v1778
    %v1780 = vadd.f32 %v1777, 1.0
    %v1781 = vadd.f32 %v1779, 1.0
    %v1782 = vrcp.pop %v1780
    %v1783 = vmul.f32 1.0, %v1782
    %v1784 = vrcp.pop %v1781
    %v1785 = vmul.f32 1.0, %v1784
    %v1786 = vtanh.pop %v1772
    %v1787 = vxor.u32 %v1773, 2147483648
    %v1788 = vmul.f32 %v1787, 1.442695
    %v1789 = vpow.pop %v1788
    %v1790 = vadd.f32 %v1789, 1.0
    %v1791 = vrcp.pop %v1790
    %v1792 = vmul.f32 1.0, %v1791
    %v1794 = vrot.slane %v1610, 7
    %v1796 = vmul.f32 %v1785, %v1794
    %v1797 = vmul.f32 %v1783, %v1786
    %v1798 = vadd.f32 %v1796, %v1797
    %v1799 = vtanh.pop %v1798
    %v1800 = vmul.f32 %v1792, %v1799
    %v1801 = vld [vmem:[#allocation8] sm:$0xff]
    %v1802 = vld [vmem:[#allocation8 + $0x8] sm:$0xff]
    %v1803 = vld [vmem:[#allocation8 + $0x10] sm:$0xff]
    %v1804 = vld [vmem:[#allocation8 + $0x18] sm:$0xff]
    %v1805 = vld [vmem:[#allocation8 + $0x20] sm:$0xff]
    %v1806 = vld [vmem:[#allocation8 + $0x28] sm:$0xff]
    %v1807 = vld [vmem:[#allocation8 + $0x30] sm:$0xff]
    %v1808 = vld [vmem:[#allocation8 + $0x38] sm:$0xff]
    %v1809 = vld [vmem:[#allocation8 + $0x40] sm:$0xff]
    %v1810 = vld [vmem:[#allocation8 + $0x48] sm:$0xff]
    %v1811 = vld [vmem:[#allocation8 + $0x50] sm:$0xff]
    %v1812 = vld [vmem:[#allocation8 + $0x58] sm:$0xff]
    %v1813 = vld [vmem:[#allocation8 + $0x60] sm:$0xff]
    %v1814 = vld [vmem:[#allocation8 + $0x68] sm:$0xff]
    %v1815 = vld [vmem:[#allocation8 + $0x70] sm:$0xff]
    %v1816 = vld [vmem:[#allocation8 + $0x78] sm:$0xff]
    %v1817 = vld [vmem:[%s5] sm:$0x1]
    %v1819 = vrot.slane %v1800, 7
    %1821 = vmatprep.subr.mxu0 0.0
    %1822 = vmatpush1.msra.mxu0 %v1801
    %1823 = vmatprep.subr.mxu0 0.0
    %1824 = vmatpush1.msra.mxu0 %v1802
    %1825 = vmatprep.subr.mxu0 0.0
    %1826 = vmatpush1.msra.mxu0 %v1803
    %1827 = vmatprep.subr.mxu0 0.0
    %1828 = vmatpush1.msra.mxu0 %v1804
    %1829 = vmatprep.subr.mxu0 0.0
    %1830 = vmatpush1.msra.mxu0 %v1805
    %1831 = vmatprep.subr.mxu0 0.0
    %1832 = vmatpush1.msra.mxu0 %v1806
    %1833 = vmatprep.subr.mxu0 0.0
    %1834 = vmatpush1.msra.mxu0 %v1807
    %1835 = vmatprep.subr.mxu0 0.0
    %1836 = vmatpush1.msra.mxu0 %v1808
    %1837 = vmatprep.subr.mxu0 0.0
    %1838 = vmatpush1.msra.mxu0 %v1809
    %1839 = vmatprep.subr.mxu0 0.0
    %1840 = vmatpush1.msra.mxu0 %v1810
    %1841 = vmatprep.subr.mxu0 0.0
    %1842 = vmatpush1.msra.mxu0 %v1811
    %1843 = vmatprep.subr.mxu0 0.0
    %1844 = vmatpush1.msra.mxu0 %v1812
    %1845 = vmatprep.subr.mxu0 0.0
    %1846 = vmatpush1.msra.mxu0 %v1813
    %1847 = vmatprep.subr.mxu0 0.0
    %1848 = vmatpush1.msra.mxu0 %v1814
    %1849 = vmatprep.subr.mxu0 0.0
    %1850 = vmatpush1.msra.mxu0 %v1815
    %1851 = vmatprep.subr.mxu0 0.0
    %1852 = vmatpush1.msra.mxu0 %v1816
    %1853 = vmatprep.subr.mxu0 0.0
    %1854 = vmatpush1.msra.mxu0 0.0
    %1855 = vmatprep.subr.mxu0 0.0
    %1856 = vmatpush1.msra.mxu0 0.0
    %1857 = vmatprep.subr.mxu0 0.0
    %1858 = vmatpush1.msra.mxu0 0.0
    %1859 = vmatprep.subr.mxu0 0.0
    %1860 = vmatpush1.msra.mxu0 0.0
    %1861 = vmatprep.subr.mxu0 0.0
    %1862 = vmatpush1.msra.mxu0 0.0
    %1863 = vmatprep.subr.mxu0 0.0
    %1864 = vmatpush1.msra.mxu0 0.0
    %1865 = vmatprep.subr.mxu0 0.0
    %1866 = vmatpush1.msra.mxu0 0.0
    %1867 = vmatprep.subr.mxu0 0.0
    %1868 = vmatpush1.msra.mxu0 0.0
    %1869 = vmatprep.subr.mxu0 0.0
    %1870 = vmatpush1.msra.mxu0 0.0
    %1871 = vmatprep.subr.mxu0 0.0
    %1872 = vmatpush1.msra.mxu0 0.0
    %1873 = vmatprep.subr.mxu0 0.0
    %1874 = vmatpush1.msra.mxu0 0.0
    %1875 = vmatprep.subr.mxu0 0.0
    %1876 = vmatpush1.msra.mxu0 0.0
    %1877 = vmatprep.subr.mxu0 0.0
    %1878 = vmatpush1.msra.mxu0 0.0
    %1879 = vmatprep.subr.mxu0 0.0
    %1880 = vmatpush1.msra.mxu0 0.0
    %1881 = vmatprep.subr.mxu0 0.0
    %1882 = vmatpush1.msra.mxu0 0.0
    %1883 = vmatprep.subr.mxu0 0.0
    %1884 = vmatpush1.msra.mxu0 0.0
    %1885 = vmatprep.mubr.f32.mxu0 0.0
    %1886 = vmatmul.mubr.f32.gmra.mrb[0].mxu0 %v1819
    %v1887 = vpop.f32.mrb[0].mxu0
    %v1888 = vadd.f32 %v1817, %v1887
    %v1889 = vpop.f32.mrb[0].mxu0
    %1890 = vdwg.mxu0
    %1891 = vst [vmem:[#allocation10] sm:$0x1] %v1888
    // Predicated region
    $region42: #{tpu_custom_call.1} parent=1 // pred_check
      _
    $region43: #{tpu_custom_call.1} parent=1 // pred_check_branch
      %1893 = sbr.rel (0) target = $region45
    $region44: #{tpu_custom_call.1} parent=1 // pred_region
      %s1895 = ssub.s32 16, 16
      %1896 = vsyncadd [#allocation4], %s1895
      %s1898 = sshll.u32 [#allocation10], 4
      %s1899 = int_to_ptr.vmem [resolvable:$true] %s1898
      %1901 = dma.vmem_to_hbm [thread:$0]  %s1899, 16, %s6, [#allocation4]
    $region45: #{tpu_custom_call.1} parent=1 // pred_fallthru
      _
    // Predicated region
    $region46: #{tpu_custom_call.1} parent=1 // pred_check
      _
    $region47: #{tpu_custom_call.1} parent=1 // pred_check_branch
      %1903 = sbr.rel (0) target = $region49
    $region48: #{tpu_custom_call.1} parent=1 // pred_region
      %1904 = dma.done [#allocation4], 16
    $region49: #{tpu_custom_call.1} parent=1 // pred_fallthru
      _
    %1905 = vsyncpa [#allocation3], 1
    %1906 = vsyncpa [#allocation6], 1
    %1907 = vsyncpa [#allocation9], 1
    %1908 = vsyncpa [#allocation4], 1

</llo_original>
